<compile_context>
chip_gen: v7x
topology: tpu7x:2x2x1
jax: 0.10.0
libtpu: 0.0.40
codegen_flags: <defaults>
</compile_context>

<pallas_src>
import jax
import jax.numpy as jnp
from jax.experimental import pallas as pl
from jax.experimental.pallas import tpu as pltpu

# ---- small deterministic config -------------------------------------------
H = 128        # config.hidden_size
V = 512        # vocab size
MAXPOS = 64    # max position embeddings
B = 2          # batch
S = 8          # source length
T_TOT = 9      # raw target length; decoder sees T_TOT - 1 tokens
T = T_TOT - 1
LN_EPS = 1e-12
AR_IN = 2 * H  # ARModel query_dim = hidden_size * 2
AR_HID = 128


def _full_spec(shape):
    # whole-array block, gridless call
    return pl.BlockSpec(shape, lambda *_: (0,) * len(shape))


# ---------------------------------------------------------------------------
# Fused forward kernel: embedding + LN, both MLP heads, vocab logits,
# copy attention (+ masked fill + scatter_add via one-hot), knn context.
# ---------------------------------------------------------------------------
def _fused_forward_kernel(tgt_ref, pos_ref, gamma_ref, beta_ref,
                          w1_ref, b1_ref, lbs_w2_ref, lbs_b2_ref,
                          ca_w2_ref, ca_b2_ref, wemb_ref, enc_ref,
                          mask_ref, onehot_ref,
                          logits_ref, pred_ref, knn_ref):
    bsz, tlen, hid = pred_ref.shape

    # --- MyEmbedding: word_emb + pos_emb, then LayerNorm (dropout = eval id) ---
    x = tgt_ref[...] + pos_ref[...]                       # (B,T,H) + (1,T,H)
    mean = jnp.mean(x, axis=-1, keepdims=True)
    var = jnp.mean(jnp.square(x - mean), axis=-1, keepdims=True)
    pred = (x - mean) * jax.lax.rsqrt(var + LN_EPS) * gamma_ref[...] + beta_ref[...]
    # TODO(synk): MyTransformerDecoder is an external class; identity stand-in.
    pred_ref[...] = pred

    pred2d = pred.reshape(bsz * tlen, hid)                # (B*T, H)

    # --- fused first layer of linear_before_softmax + copy_attention heads ---
    h1 = jnp.tanh(jnp.dot(pred2d, w1_ref[...],
                          preferred_element_type=jnp.float32) + b1_ref[...])
    gen2d = jnp.dot(h1[:, :hid], lbs_w2_ref[...],
                    preferred_element_type=jnp.float32) + lbs_b2_ref[...]
    copy2d = jnp.dot(h1[:, hid:], ca_w2_ref[...],
                     preferred_element_type=jnp.float32) + ca_b2_ref[...]
    gen = gen2d.reshape(bsz, tlen, hid)
    copy_pred = copy2d.reshape(bsz, tlen, hid)

    # --- knn context: [pooled CLS encoder output ; generation_prediction] ---
    enc = enc_ref[...]                                    # (B,S,H)
    pooled = jnp.broadcast_to(enc[:, 0:1, :], (bsz, tlen, hid))
    knn_ref[...] = jnp.concatenate([pooled, gen], axis=-1)

    # --- vocab logits: gen @ word_emb.T (trans-B contraction, no relayout) ---
    logits2d = jax.lax.dot_general(gen2d, wemb_ref[...],
                                   (((1,), (1,)), ((), ())),
                                   preferred_element_type=jnp.float32)
    logits = logits2d.reshape(bsz, tlen, -1)              # (B,T,V)

    # --- copy attention scores + masked_fill_(mask==0, 0.0) ---
    scores = jax.lax.dot_general(copy_pred, enc,
                                 (((2,), (2,)), ((0,), (0,))),
                                 preferred_element_type=jnp.float32)  # (B,T,S)
    scores = jnp.where(mask_ref[...] != 0.0, scores, 0.0)

    # --- scatter_add_ into vocab logits via batched one-hot matmul ---
    logits_ref[...] = logits + jax.lax.dot_general(
        scores, onehot_ref[...], (((2,), (1,)), ((0,), (0,))),
        preferred_element_type=jnp.float32)


def model_forward(encoder_output, target_ids, source_ids, source_attn_mask,
                  word_emb, pos_emb, ln_gamma, ln_beta,
                  head_w1, head_b1, lbs_w2, lbs_b2, ca_w2, ca_b2):
    b, t_tot = target_ids.shape
    t = t_tot - 1
    h = encoder_output.shape[-1]
    v = word_emb.shape[0]

    # data-dependent gathers / one-hot stay in JAX glue (tiny arrays)
    tgt_emb = word_emb[target_ids[:, :-1]]                          # (B,T,H)
    pos = pos_emb[:t][None]                                         # (1,T,H)
    mask = source_attn_mask.astype(jnp.float32)[:, None, :]         # (B,1,S)
    onehot = (source_ids[:, :, None] ==
              jnp.arange(v, dtype=source_ids.dtype)[None, None, :]
              ).astype(jnp.float32)                                 # (B,S,V)

    out_shapes = (jax.ShapeDtypeStruct((b, t, v), jnp.float32),     # logits
                  jax.ShapeDtypeStruct((b, t, h), jnp.float32),     # prediction
                  jax.ShapeDtypeStruct((b, t, 2 * h), jnp.float32)) # knn_context
    in_arrays = (tgt_emb, pos, ln_gamma, ln_beta, head_w1, head_b1,
                 lbs_w2, lbs_b2, ca_w2, ca_b2, word_emb, encoder_output,
                 mask, onehot)

    logits, prediction, knn_context = pl.pallas_call(
        _fused_forward_kernel,
        out_shape=out_shapes,
        in_specs=[_full_spec(a.shape) for a in in_arrays],
        out_specs=[_full_spec(o.shape) for o in out_shapes],
    )(*in_arrays)
    return logits, prediction, knn_context


# ---------------------------------------------------------------------------
# ARModel: 5 Linear layers, ReLU, final log_softmax over dim=1 (single kernel)
# ---------------------------------------------------------------------------
def _ar_kernel(x_ref, w1, b1, w2, b2, w3, b3, w4, b4, w5, b5, o_ref):
    h = jnp.maximum(jnp.dot(x_ref[...], w1[...],
                            preferred_element_type=jnp.float32) + b1[...], 0.0)
    h = jnp.maximum(jnp.dot(h, w2[...],
                            preferred_element_type=jnp.float32) + b2[...], 0.0)
    h = jnp.maximum(jnp.dot(h, w3[...],
                            preferred_element_type=jnp.float32) + b3[...], 0.0)
    h = jnp.maximum(jnp.dot(h, w4[...],
                            preferred_element_type=jnp.float32) + b4[...], 0.0)
    z = jnp.dot(h, w5[...], preferred_element_type=jnp.float32) + b5[...]
    z = z - jnp.max(z, axis=1, keepdims=True)
    o_ref[...] = z - jnp.log(jnp.sum(jnp.exp(z), axis=1, keepdims=True))


def ar_model_forward(x, params):
    n = x.shape[0]
    specs = [_full_spec(x.shape)] + [_full_spec(p.shape) for p in params]
    return pl.pallas_call(
        _ar_kernel,
        out_shape=jax.ShapeDtypeStruct((n, 2), jnp.float32),
        in_specs=specs,
        out_specs=_full_spec((n, 2)),
    )(x, *params)


# ---------------------------------------------------------------------------
# Pure-JAX reference (correctness check for the fused kernel)
# ---------------------------------------------------------------------------
def _reference_forward(encoder_output, target_ids, source_ids, source_attn_mask,
                       word_emb, pos_emb, ln_gamma, ln_beta,
                       lbs_w1, lbs_b1, lbs_w2, lbs_b2,
                       ca_w1, ca_b1, ca_w2, ca_b2):
    b, t_tot = target_ids.shape
    t = t_tot - 1
    x = word_emb[target_ids[:, :-1]] + pos_emb[:t][None]
    mean = x.mean(-1, keepdims=True)
    var = ((x - mean) ** 2).mean(-1, keepdims=True)
    pred = (x - mean) / jnp.sqrt(var + LN_EPS) * ln_gamma + ln_beta
    gen = jnp.tanh(pred @ lbs_w1 + lbs_b1) @ lbs_w2 + lbs_b2
    cp = jnp.tanh(pred @ ca_w1 + ca_b1) @ ca_w2 + ca_b2
    logits = jnp.einsum('btd,vd->btv', gen, word_emb)
    scores = jnp.einsum('btd,bsd->bts', cp, encoder_output)
    scores = jnp.where(source_attn_mask[:, None, :] != 0, scores, 0.0)
    bi = jnp.arange(b)[:, None, None]
    ti = jnp.arange(t)[None, :, None]
    logits = logits.at[bi, ti, source_ids[:, None, :]].add(scores)
    knn = jnp.concatenate(
        [jnp.broadcast_to(encoder_output[:, 0:1, :], pred.shape), gen], axis=-1)
    return logits, pred, knn


# ---------------------------------------------------------------------------
if __name__ == "__main__":
    key = jax.random.PRNGKey(0)
    ks = jax.random.split(key, 24)

    def nrm(k, shape, scale=0.02):
        return (scale * jax.random.normal(k, shape)).astype(jnp.float32)

    # embedding table (pembedding)
    word_emb = nrm(ks[0], (V, H))
    pos_emb = nrm(ks[1], (MAXPOS, H))
    ln_gamma = jnp.ones((1, H), jnp.float32)
    ln_beta = jnp.zeros((1, H), jnp.float32)

    # linear_before_softmax: Linear(H,H) -> Tanh -> Linear(H,H)
    lbs_w1, lbs_b1 = nrm(ks[2], (H, H)), nrm(ks[3], (1, H))
    lbs_w2, lbs_b2 = nrm(ks[4], (H, H)), nrm(ks[5], (1, H))
    # copy_attention: Linear(H,H) -> Tanh -> Linear(H,H)
    ca_w1, ca_b1 = nrm(ks[6], (H, H)), nrm(ks[7], (1, H))
    ca_w2, ca_b2 = nrm(ks[8], (H, H)), nrm(ks[9], (1, H))

    # merged first layer of the two heads (done once, outside the forward)
    head_w1 = jnp.concatenate([lbs_w1, ca_w1], axis=1)   # (H, 2H)
    head_b1 = jnp.concatenate([lbs_b1, ca_b1], axis=1)   # (1, 2H)

    # ARModel params: Linear(2H,128) + 3x Linear(128,128) + Linear(128,2)
    ar_params = (
        nrm(ks[10], (AR_IN, AR_HID)), nrm(ks[11], (1, AR_HID)),
        nrm(ks[12], (AR_HID, AR_HID)), nrm(ks[13], (1, AR_HID)),
        nrm(ks[14], (AR_HID, AR_HID)), nrm(ks[15], (1, AR_HID)),
        nrm(ks[16], (AR_HID, AR_HID)), nrm(ks[17], (1, AR_HID)),
        nrm(ks[18], (AR_HID, 2)), nrm(ks[19], (1, 2)),
    )

    # inputs
    encoder_output = nrm(ks[20], (B, S, H), scale=1.0)   # stands in for BERT output
    target_ids = jax.random.randint(ks[21], (B, T_TOT), 0, V, dtype=jnp.int32)
    source_ids = jax.random.randint(ks[22], (B, S), 0, V, dtype=jnp.int32)
    source_attn_mask = jnp.ones((B, S), jnp.int32).at[1, S - 2:].set(0)

    logits, prediction, knn_context = model_forward(
        encoder_output, target_ids, source_ids, source_attn_mask,
        word_emb, pos_emb, ln_gamma, ln_beta,
        head_w1, head_b1, lbs_w2, lbs_b2, ca_w2, ca_b2)

    # ARModel on the knn context (B*T, 2H) -> (B*T, 2) log-probs
    ar_out = ar_model_forward(knn_context.reshape(B * T, AR_IN), ar_params)

    jax.block_until_ready((logits, prediction, knn_context, ar_out))

    # shape / sanity checks
    assert logits.shape == (B, T, V)
    assert prediction.shape == (B, T, H)
    assert knn_context.shape == (B, T, 2 * H)
    assert ar_out.shape == (B * T, 2)
    assert bool(jnp.all(jnp.isfinite(logits)))
    assert bool(jnp.all(jnp.isfinite(ar_out)))
    assert bool(jnp.allclose(jnp.sum(jnp.exp(ar_out), axis=1), 1.0, atol=1e-4))

    # numerical check of the fused kernel against a pure-JAX reference
    ref_logits, ref_pred, ref_knn = _reference_forward(
        encoder_output, target_ids, source_ids, source_attn_mask,
        word_emb, pos_emb, ln_gamma, ln_beta,
        lbs_w1, lbs_b1, lbs_w2, lbs_b2, ca_w1, ca_b1, ca_w2, ca_b2)
    assert bool(jnp.allclose(logits, ref_logits, atol=1e-3, rtol=1e-3))
    assert bool(jnp.allclose(prediction, ref_pred, atol=1e-3, rtol=1e-3))
    assert bool(jnp.allclose(knn_context, ref_knn, atol=1e-3, rtol=1e-3))

    print("KERNEL_OK")
</pallas_src>

<mosaic_0001>
module attributes {stable_mosaic.version = 11 : i64} {
  func.func @_fused_forward_kernel(%arg0: memref<2x8x128xf32, #tpu.memory_space<vmem>>, %arg1: memref<1x8x128xf32, #tpu.memory_space<vmem>>, %arg2: memref<1x128xf32, #tpu.memory_space<vmem>>, %arg3: memref<1x128xf32, #tpu.memory_space<vmem>>, %arg4: memref<128x256xf32, #tpu.memory_space<vmem>>, %arg5: memref<1x256xf32, #tpu.memory_space<vmem>>, %arg6: memref<128x128xf32, #tpu.memory_space<vmem>>, %arg7: memref<1x128xf32, #tpu.memory_space<vmem>>, %arg8: memref<128x128xf32, #tpu.memory_space<vmem>>, %arg9: memref<1x128xf32, #tpu.memory_space<vmem>>, %arg10: memref<512x128xf32, #tpu.memory_space<vmem>>, %arg11: memref<2x8x128xf32, #tpu.memory_space<vmem>>, %arg12: memref<2x1x8xf32, #tpu.memory_space<vmem>>, %arg13: memref<2x8x512xf32, #tpu.memory_space<vmem>>, %arg14: memref<2x8x512xf32, #tpu.memory_space<vmem>>, %arg15: memref<2x8x128xf32, #tpu.memory_space<vmem>>, %arg16: memref<2x8x256xf32, #tpu.memory_space<vmem>>) attributes {dimension_semantics = [], scalar_prefetch = 0 : i64, scratch_operands = 0 : i64, tpu.core_type = #tpu.core_type<tc>} {
    %c0 = arith.constant 0 : index
    %c0_0 = arith.constant 0 : index
    %c0_1 = arith.constant 0 : index
    %0 = vector.load %arg0[%c0, %c0_0, %c0_1] : memref<2x8x128xf32, #tpu.memory_space<vmem>>, vector<2x8x128xf32>
    %c0_2 = arith.constant 0 : index
    %c0_3 = arith.constant 0 : index
    %c0_4 = arith.constant 0 : index
    %1 = vector.load %arg1[%c0_2, %c0_3, %c0_4] : memref<1x8x128xf32, #tpu.memory_space<vmem>>, vector<1x8x128xf32>
    %2 = vector.broadcast %1 : vector<1x8x128xf32> to vector<2x8x128xf32>
    %3 = arith.addf %0, %2 : vector<2x8x128xf32>
    %cst = arith.constant dense<0.000000e+00> : vector<2x8xf32>
    %4 = vector.multi_reduction <add>, %3, %cst [2] : vector<2x8x128xf32> to vector<2x8xf32>
    %5 = vector.shape_cast %4 : vector<2x8xf32> to vector<2x8x1xf32>
    %cst_5 = arith.constant 1.280000e+02 : f32
    %6 = vector.broadcast %cst_5 : f32 to vector<2x8x1xf32>
    %7 = arith.divf %5, %6 : vector<2x8x1xf32>
    %8 = vector.broadcast %7 : vector<2x8x1xf32> to vector<2x8x128xf32>
    %9 = arith.subf %3, %8 : vector<2x8x128xf32>
    %10 = arith.mulf %9, %9 : vector<2x8x128xf32>
    %cst_6 = arith.constant dense<0.000000e+00> : vector<2x8xf32>
    %11 = vector.multi_reduction <add>, %10, %cst_6 [2] : vector<2x8x128xf32> to vector<2x8xf32>
    %12 = vector.shape_cast %11 : vector<2x8xf32> to vector<2x8x1xf32>
    %cst_7 = arith.constant 1.280000e+02 : f32
    %13 = vector.broadcast %cst_7 : f32 to vector<2x8x1xf32>
    %14 = arith.divf %12, %13 : vector<2x8x1xf32>
    %15 = vector.broadcast %7 : vector<2x8x1xf32> to vector<2x8x128xf32>
    %16 = arith.subf %3, %15 : vector<2x8x128xf32>
    %cst_8 = arith.constant 9.99999996E-13 : f32
    %17 = vector.broadcast %cst_8 : f32 to vector<2x8x1xf32>
    %18 = arith.addf %14, %17 : vector<2x8x1xf32>
    %19 = math.rsqrt %18 : vector<2x8x1xf32>
    %20 = vector.broadcast %19 : vector<2x8x1xf32> to vector<2x8x128xf32>
    %21 = arith.mulf %16, %20 : vector<2x8x128xf32>
    %c0_9 = arith.constant 0 : index
    %c0_10 = arith.constant 0 : index
    %22 = vector.load %arg2[%c0_9, %c0_10] : memref<1x128xf32, #tpu.memory_space<vmem>>, vector<1x128xf32>
    %23 = vector.shape_cast %22 : vector<1x128xf32> to vector<1x1x128xf32>
    %24 = vector.broadcast %23 : vector<1x1x128xf32> to vector<2x8x128xf32>
    %25 = arith.mulf %21, %24 : vector<2x8x128xf32>
    %c0_11 = arith.constant 0 : index
    %c0_12 = arith.constant 0 : index
    %26 = vector.load %arg3[%c0_11, %c0_12] : memref<1x128xf32, #tpu.memory_space<vmem>>, vector<1x128xf32>
    %27 = vector.shape_cast %26 : vector<1x128xf32> to vector<1x1x128xf32>
    %28 = vector.broadcast %27 : vector<1x1x128xf32> to vector<2x8x128xf32>
    %29 = arith.addf %25, %28 : vector<2x8x128xf32>
    %c0_13 = arith.constant 0 : index
    %c0_14 = arith.constant 0 : index
    %c0_15 = arith.constant 0 : index
    %30 = vector.load %arg15[%c0_13, %c0_14, %c0_15] : memref<2x8x128xf32, #tpu.memory_space<vmem>>, vector<2x8x128xf32>
    tpu.vector_store %arg15[%c0_13, %c0_14, %c0_15], %29 {strides = array<i32>} : memref<2x8x128xf32, #tpu.memory_space<vmem>>, vector<2x8x128xf32>,
    %31 = vector.shape_cast %29 : vector<2x8x128xf32> to vector<16x128xf32>
    %c0_16 = arith.constant 0 : index
    %c0_17 = arith.constant 0 : index
    %32 = vector.load %arg4[%c0_16, %c0_17] : memref<128x256xf32, #tpu.memory_space<vmem>>, vector<128x256xf32>
    %cst_18 = arith.constant dense<0.000000e+00> : vector<16x256xf32>
    %33 = tpu.matmul %31, %32, %cst_18 {dimension_numbers = #tpu.dot_dimension_numbers<[1], [0], [0], [1], [0, 0, 1, 1], [], []>} : vector<16x128xf32>, vector<128x256xf32>, vector<16x256xf32> -> vector<16x256xf32>
    %c0_19 = arith.constant 0 : index
    %c0_20 = arith.constant 0 : index
    %34 = vector.load %arg5[%c0_19, %c0_20] : memref<1x256xf32, #tpu.memory_space<vmem>>, vector<1x256xf32>
    %35 = vector.broadcast %34 : vector<1x256xf32> to vector<16x256xf32>
    %36 = arith.addf %33, %35 : vector<16x256xf32>
    %37 = math.tanh %36 : vector<16x256xf32>
    %38 = vector.extract_strided_slice %37 {offsets = [0, 0], sizes = [16, 128], strides = [1, 1]} : vector<16x256xf32> to vector<16x128xf32>
    %c0_21 = arith.constant 0 : index
    %c0_22 = arith.constant 0 : index
    %39 = vector.load %arg6[%c0_21, %c0_22] : memref<128x128xf32, #tpu.memory_space<vmem>>, vector<128x128xf32>
    %cst_23 = arith.constant dense<0.000000e+00> : vector<16x128xf32>
    %40 = tpu.matmul %38, %39, %cst_23 {dimension_numbers = #tpu.dot_dimension_numbers<[1], [0], [0], [1], [0, 0, 1, 1], [], []>} : vector<16x128xf32>, vector<128x128xf32>, vector<16x128xf32> -> vector<16x128xf32>
    %c0_24 = arith.constant 0 : index
    %c0_25 = arith.constant 0 : index
    %41 = vector.load %arg7[%c0_24, %c0_25] : memref<1x128xf32, #tpu.memory_space<vmem>>, vector<1x128xf32>
    %42 = vector.broadcast %41 : vector<1x128xf32> to vector<16x128xf32>
    %43 = arith.addf %40, %42 : vector<16x128xf32>
    %44 = vector.extract_strided_slice %37 {offsets = [0, 128], sizes = [16, 128], strides = [1, 1]} : vector<16x256xf32> to vector<16x128xf32>
    %c0_26 = arith.constant 0 : index
    %c0_27 = arith.constant 0 : index
    %45 = vector.load %arg8[%c0_26, %c0_27] : memref<128x128xf32, #tpu.memory_space<vmem>>, vector<128x128xf32>
    %cst_28 = arith.constant dense<0.000000e+00> : vector<16x128xf32>
    %46 = tpu.matmul %44, %45, %cst_28 {dimension_numbers = #tpu.dot_dimension_numbers<[1], [0], [0], [1], [0, 0, 1, 1], [], []>} : vector<16x128xf32>, vector<128x128xf32>, vector<16x128xf32> -> vector<16x128xf32>
    %c0_29 = arith.constant 0 : index
    %c0_30 = arith.constant 0 : index
    %47 = vector.load %arg9[%c0_29, %c0_30] : memref<1x128xf32, #tpu.memory_space<vmem>>, vector<1x128xf32>
    %48 = vector.broadcast %47 : vector<1x128xf32> to vector<16x128xf32>
    %49 = arith.addf %46, %48 : vector<16x128xf32>
    %50 = vector.shape_cast %43 : vector<16x128xf32> to vector<2x8x128xf32>
    %51 = vector.shape_cast %49 : vector<16x128xf32> to vector<2x8x128xf32>
    %c0_31 = arith.constant 0 : index
    %c0_32 = arith.constant 0 : index
    %c0_33 = arith.constant 0 : index
    %52 = vector.load %arg11[%c0_31, %c0_32, %c0_33] : memref<2x8x128xf32, #tpu.memory_space<vmem>>, vector<2x8x128xf32>
    %53 = vector.extract_strided_slice %52 {offsets = [0, 0, 0], sizes = [2, 1, 128], strides = [1, 1, 1]} : vector<2x8x128xf32> to vector<2x1x128xf32>
    %54 = vector.shape_cast %53 : vector<2x1x128xf32> to vector<2x1x128xf32>
    %55 = vector.broadcast %54 : vector<2x1x128xf32> to vector<2x8x128xf32>
    %56 = tpu.concatenate %55, %50 in 2 : vector<2x8x128xf32>, vector<2x8x128xf32> -> vector<2x8x256xf32>
    %c0_34 = arith.constant 0 : index
    %c0_35 = arith.constant 0 : index
    %c0_36 = arith.constant 0 : index
    %57 = vector.load %arg16[%c0_34, %c0_35, %c0_36] : memref<2x8x256xf32, #tpu.memory_space<vmem>>, vector<2x8x256xf32>
    tpu.vector_store %arg16[%c0_34, %c0_35, %c0_36], %56 {strides = array<i32>} : memref<2x8x256xf32, #tpu.memory_space<vmem>>, vector<2x8x256xf32>,
    %c0_37 = arith.constant 0 : index
    %c0_38 = arith.constant 0 : index
    %58 = vector.load %arg10[%c0_37, %c0_38] : memref<512x128xf32, #tpu.memory_space<vmem>>, vector<512x128xf32>
    %cst_39 = arith.constant dense<0.000000e+00> : vector<16x512xf32>
    %59 = tpu.matmul %43, %58, %cst_39 {dimension_numbers = #tpu.dot_dimension_numbers<[1], [1], [0], [0], [0, 0, 1, 0], [], []>} : vector<16x128xf32>, vector<512x128xf32>, vector<16x512xf32> -> vector<16x512xf32>
    %60 = vector.shape_cast %59 : vector<16x512xf32> to vector<2x8x512xf32>
    %cst_40 = arith.constant dense<0.000000e+00> : vector<2x8x8xf32>
    %61 = tpu.matmul %51, %52, %cst_40 {dimension_numbers = #tpu.dot_dimension_numbers<[2], [2], [1], [1], [0, 0, 0, 1, 1, 1], [0], [0]>} : vector<2x8x128xf32>, vector<2x8x128xf32>, vector<2x8x8xf32> -> vector<2x8x8xf32>
    %c0_41 = arith.constant 0 : index
    %c0_42 = arith.constant 0 : index
    %c0_43 = arith.constant 0 : index
    %62 = vector.load %arg12[%c0_41, %c0_42, %c0_43] : memref<2x1x8xf32, #tpu.memory_space<vmem>>, vector<2x1x8xf32>
    %cst_44 = arith.constant 0.000000e+00 : f32
    %63 = vector.broadcast %cst_44 : f32 to vector<2x1x8xf32>
    %64 = arith.cmpf one, %62, %63 : vector<2x1x8xf32>
    %cst_45 = arith.constant 0.000000e+00 : f32
    %65 = vector.shape_cast %64 : vector<2x1x8xi1> to vector<2x1x8xi1>
    %66 = vector.broadcast %65 : vector<2x1x8xi1> to vector<2x8x8xi1>
    %67 = vector.broadcast %cst_45 : f32 to vector<2x8x8xf32>
    %68 = arith.select %66, %61, %67 : vector<2x8x8xi1>, vector<2x8x8xf32>
    %c0_46 = arith.constant 0 : index
    %c0_47 = arith.constant 0 : index
    %c0_48 = arith.constant 0 : index
    %69 = vector.load %arg13[%c0_46, %c0_47, %c0_48] : memref<2x8x512xf32, #tpu.memory_space<vmem>>, vector<2x8x512xf32>
    %cst_49 = arith.constant dense<0.000000e+00> : vector<2x8x512xf32>
    %70 = tpu.matmul %68, %69, %cst_49 {dimension_numbers = #tpu.dot_dimension_numbers<[2], [1], [1], [2], [0, 0, 0, 1, 1, 2], [0], [0]>} : vector<2x8x8xf32>, vector<2x8x512xf32>, vector<2x8x512xf32> -> vector<2x8x512xf32>
    %71 = arith.addf %60, %70 : vector<2x8x512xf32>
    %c0_50 = arith.constant 0 : index
    %c0_51 = arith.constant 0 : index
    %c0_52 = arith.constant 0 : index
    %72 = vector.load %arg14[%c0_50, %c0_51, %c0_52] : memref<2x8x512xf32, #tpu.memory_space<vmem>>, vector<2x8x512xf32>
    tpu.vector_store %arg14[%c0_50, %c0_51, %c0_52], %71 {strides = array<i32>} : memref<2x8x512xf32, #tpu.memory_space<vmem>>, vector<2x8x512xf32>,
    return
  }
}

</mosaic_0001>

<llo_original>
// kernel: tpu_custom_call.1
$region0: #{tpu_custom_call.1}
  #allocation0 [shape = 'u32[]', space=smem, size = 0x4, offset = 0x4, fixed_abs, tag = 'smem constant byte address 0x4 - core index']
  #allocation1 [shape = 'u32[144,128]{1,0:T(1,128)}', space=vmem, size = 0x12000, scoped, tag = 'internal scratch']
  %s0 = inlined_call_operand.hbm [shape: f32[2,8,128], index: 0, kind: input, shape index: {}]
  %s1 = inlined_call_operand.hbm [shape: f32[1,8,128], index: 1, kind: input, shape index: {}]
  %s2 = inlined_call_operand.vmem [shape: f32[1,128], index: 2, kind: input, shape index: {}]
  %s3 = inlined_call_operand.vmem [shape: f32[1,128], index: 3, kind: input, shape index: {}]
  %s4 = inlined_call_operand.hbm [shape: f32[128,256], index: 4, kind: input, shape index: {}]
  %s5 = inlined_call_operand.vmem [shape: f32[1,256], index: 5, kind: input, shape index: {}]
  %s6 = inlined_call_operand.hbm [shape: f32[128,128], index: 6, kind: input, shape index: {}]
  %s7 = inlined_call_operand.vmem [shape: f32[1,128], index: 7, kind: input, shape index: {}]
  %s8 = inlined_call_operand.hbm [shape: f32[128,128], index: 8, kind: input, shape index: {}]
  %s9 = inlined_call_operand.vmem [shape: f32[1,128], index: 9, kind: input, shape index: {}]
  %s10 = inlined_call_operand.hbm [shape: f32[512,128], index: 10, kind: input, shape index: {}]
  %s11 = inlined_call_operand.vmem [shape: f32[2,8,128], index: 11, kind: input, shape index: {}]
  %s12 = inlined_call_operand.vmem [shape: f32[2,1,8], index: 12, kind: input, shape index: {}]
  %s13 = inlined_call_operand.hbm [shape: f32[2,8,512], index: 13, kind: input, shape index: {}]
  %s14 = inlined_call_operand.hbm [shape: f32[2,8,512], index: 14, kind: output, shape index: {0}]
  %s15 = inlined_call_operand.hbm [shape: f32[2,8,128], index: 15, kind: output, shape index: {1}]
  %s16 = inlined_call_operand.hbm [shape: f32[2,8,256], index: 16, kind: output, shape index: {2}]
  %17 = xla_tuple %s14, %s15, %s16
  %s18 = sld [smem:[#allocation0]]
  $region110: #{tpu_custom_call.1} parent=0
    _
  %s20 = ssub.s32 1, %s18
  %s21 = scalar_select 0, %s20, %s18
  $region1: #{tpu_custom_call.1} parent=0
    #allocation2 [shape = 'u8[8192]{0}', space=vmem, size = 0x2000, scoped, tag = 'input window, operand 0, single buffered']
    #allocation3 [shape = 's32[1]{0}', space=sflag, size = 0x4, scoped, tag = 'scoped memory for tpu_custom_call.1']
    #allocation4 [shape = 's32[1]{0}', space=sflag, size = 0x4, scoped, tag = 'scoped memory for tpu_custom_call.1']
    #allocation5 [shape = 'u8[4096]{0}', space=vmem, size = 0x1000, scoped, tag = 'input window, operand 1, single buffered']
    #allocation6 [shape = 's32[1]{0}', space=sflag, size = 0x4, scoped, tag = 'scoped memory for tpu_custom_call.1']
    #allocation7 [shape = 'u8[131072]{0}', space=vmem, size = 0x20000, scoped, tag = 'input window, operand 4, single buffered']
    #allocation8 [shape = 'u8[65536]{0}', space=vmem, size = 0x10000, scoped, tag = 'input window, operand 6, single buffered']
    #allocation9 [shape = 's32[1]{0}', space=sflag, size = 0x4, scoped, tag = 'scoped memory for tpu_custom_call.1']
    #allocation10 [shape = 'u8[65536]{0}', space=vmem, size = 0x10000, scoped, tag = 'input window, operand 8, single buffered']
    #allocation11 [shape = 'u8[262144]{0}', space=vmem, size = 0x40000, scoped, tag = 'input window, operand 10, single buffered']
    #allocation12 [shape = 's32[1]{0}', space=sflag, size = 0x4, scoped, tag = 'scoped memory for tpu_custom_call.1']
    #allocation13 [shape = 'u8[32768]{0}', space=vmem, size = 0x8000, scoped, tag = 'input window, operand 13, single buffered']
    #allocation14 [shape = 'u8[32768]{0}', space=vmem, size = 0x8000, scoped, tag = 'output window, operand 0, single buffered']
    #allocation15 [shape = 'u8[8192]{0}', space=vmem, size = 0x2000, scoped, tag = 'output window, operand 1, single buffered']
    #allocation16 [shape = 's32[1]{0}', space=sflag, size = 0x4, scoped, tag = 'scoped memory for tpu_custom_call.1']
    #allocation17 [shape = 'u8[16384]{0}', space=vmem, size = 0x4000, scoped, tag = 'output window, operand 2, single buffered']
    %22 = vsyncpa [#allocation3], 0
    %23 = vsyncpa [#allocation6], 0
    %24 = vsyncpa [#allocation9], 0
    %25 = vsyncpa [#allocation12], 0
    %26 = vsyncpa [#allocation4], 0
    %27 = vsyncpa [#allocation16], 0
    // Predicated region
    $region2: #{tpu_custom_call.1} parent=1 // pred_check
      _
    $region3: #{tpu_custom_call.1} parent=1 // pred_check_branch
      %29 = sbr.rel (0) target = $region5
    $region4: #{tpu_custom_call.1} parent=1 // pred_region
      %s31 = ssub.s32 256, 256
      %32 = vsyncadd [#allocation3], %s31
      %s33 = sshll.u32 [#allocation2], 4
      %s34 = int_to_ptr.vmem [resolvable:$true] %s33
      %39 = dma.hbm_to_vmem [thread:$0]  %s0, 256, %s34, [#allocation3], 128, 128, 8
    $region5: #{tpu_custom_call.1} parent=1 // pred_fallthru
      _
    // Predicated region
    $region6: #{tpu_custom_call.1} parent=1 // pred_check
      _
    $region7: #{tpu_custom_call.1} parent=1 // pred_check_branch
      %41 = sbr.rel (0) target = $region9
    $region8: #{tpu_custom_call.1} parent=1 // pred_region
      %s43 = ssub.s32 128, 128
      %44 = vsyncadd [#allocation6], %s43
      %s46 = sshll.u32 [#allocation5], 4
      %s47 = int_to_ptr.vmem [resolvable:$true] %s46
      %49 = dma.hbm_to_vmem [thread:$0]  %s1, 128, %s47, [#allocation6]
    $region9: #{tpu_custom_call.1} parent=1 // pred_fallthru
      _
    // Predicated region
    $region10: #{tpu_custom_call.1} parent=1 // pred_check
      _
    $region11: #{tpu_custom_call.1} parent=1 // pred_check_branch
      %51 = sbr.rel (0) target = $region13
    $region12: #{tpu_custom_call.1} parent=1 // pred_region
      _
    $region13: #{tpu_custom_call.1} parent=1 // pred_fallthru
      _
    // Predicated region
    $region14: #{tpu_custom_call.1} parent=1 // pred_check
      _
    $region15: #{tpu_custom_call.1} parent=1 // pred_check_branch
      %53 = sbr.rel (0) target = $region17
    $region16: #{tpu_custom_call.1} parent=1 // pred_region
      _
    $region17: #{tpu_custom_call.1} parent=1 // pred_fallthru
      _
    // Predicated region
    $region18: #{tpu_custom_call.1} parent=1 // pred_check
      _
    $region19: #{tpu_custom_call.1} parent=1 // pred_check_branch
      %55 = sbr.rel (0) target = $region21
    $region20: #{tpu_custom_call.1} parent=1 // pred_region
      %s57 = ssub.s32 4096, 4096
      %58 = vsyncadd [#allocation6], %s57
      %s59 = sshll.u32 [#allocation7], 4
      %s60 = int_to_ptr.vmem [resolvable:$true] %s59
      %65 = dma.hbm_to_vmem [thread:$0]  %s4, 4096, %s60, [#allocation6], 256, 256, 16
    $region21: #{tpu_custom_call.1} parent=1 // pred_fallthru
      _
    // Predicated region
    $region22: #{tpu_custom_call.1} parent=1 // pred_check
      _
    $region23: #{tpu_custom_call.1} parent=1 // pred_check_branch
      %67 = sbr.rel (0) target = $region25
    $region24: #{tpu_custom_call.1} parent=1 // pred_region
      _
    $region25: #{tpu_custom_call.1} parent=1 // pred_fallthru
      _
    // Predicated region
    $region26: #{tpu_custom_call.1} parent=1 // pred_check
      _
    $region27: #{tpu_custom_call.1} parent=1 // pred_check_branch
      %69 = sbr.rel (0) target = $region29
    $region28: #{tpu_custom_call.1} parent=1 // pred_region
      %s71 = ssub.s32 2048, 2048
      %72 = vsyncadd [#allocation9], %s71
      %s73 = sshll.u32 [#allocation8], 4
      %s74 = int_to_ptr.vmem [resolvable:$true] %s73
      %79 = dma.hbm_to_vmem [thread:$0]  %s6, 2048, %s74, [#allocation9], 128, 128, 8
    $region29: #{tpu_custom_call.1} parent=1 // pred_fallthru
      _
    // Predicated region
    $region30: #{tpu_custom_call.1} parent=1 // pred_check
      _
    $region31: #{tpu_custom_call.1} parent=1 // pred_check_branch
      %81 = sbr.rel (0) target = $region33
    $region32: #{tpu_custom_call.1} parent=1 // pred_region
      _
    $region33: #{tpu_custom_call.1} parent=1 // pred_fallthru
      _
    // Predicated region
    $region34: #{tpu_custom_call.1} parent=1 // pred_check
      _
    $region35: #{tpu_custom_call.1} parent=1 // pred_check_branch
      %83 = sbr.rel (0) target = $region37
    $region36: #{tpu_custom_call.1} parent=1 // pred_region
      %s85 = ssub.s32 2048, 2048
      %86 = vsyncadd [#allocation9], %s85
      %s87 = sshll.u32 [#allocation10], 4
      %s88 = int_to_ptr.vmem [resolvable:$true] %s87
      %93 = dma.hbm_to_vmem [thread:$0]  %s8, 2048, %s88, [#allocation9], 128, 128, 8
    $region37: #{tpu_custom_call.1} parent=1 // pred_fallthru
      _
    // Predicated region
    $region38: #{tpu_custom_call.1} parent=1 // pred_check
      _
    $region39: #{tpu_custom_call.1} parent=1 // pred_check_branch
      %95 = sbr.rel (0) target = $region41
    $region40: #{tpu_custom_call.1} parent=1 // pred_region
      _
    $region41: #{tpu_custom_call.1} parent=1 // pred_fallthru
      _
    // Predicated region
    $region42: #{tpu_custom_call.1} parent=1 // pred_check
      _
    $region43: #{tpu_custom_call.1} parent=1 // pred_check_branch
      %97 = sbr.rel (0) target = $region45
    $region44: #{tpu_custom_call.1} parent=1 // pred_region
      %s99 = ssub.s32 8192, 8192
      %100 = vsyncadd [#allocation12], %s99
      %s101 = sshll.u32 [#allocation11], 4
      %s102 = int_to_ptr.vmem [resolvable:$true] %s101
      %107 = dma.hbm_to_vmem [thread:$0]  %s10, 8192, %s102, [#allocation12], 128, 128, 8
    $region45: #{tpu_custom_call.1} parent=1 // pred_fallthru
      _
    // Predicated region
    $region46: #{tpu_custom_call.1} parent=1 // pred_check
      _
    $region47: #{tpu_custom_call.1} parent=1 // pred_check_branch
      %109 = sbr.rel (0) target = $region49
    $region48: #{tpu_custom_call.1} parent=1 // pred_region
      _
    $region49: #{tpu_custom_call.1} parent=1 // pred_fallthru
      _
    // Predicated region
    $region50: #{tpu_custom_call.1} parent=1 // pred_check
      _
    $region51: #{tpu_custom_call.1} parent=1 // pred_check_branch
      %111 = sbr.rel (0) target = $region53
    $region52: #{tpu_custom_call.1} parent=1 // pred_region
      _
    $region53: #{tpu_custom_call.1} parent=1 // pred_fallthru
      _
    // Predicated region
    $region54: #{tpu_custom_call.1} parent=1 // pred_check
      _
    $region55: #{tpu_custom_call.1} parent=1 // pred_check_branch
      %113 = sbr.rel (0) target = $region57
    $region56: #{tpu_custom_call.1} parent=1 // pred_region
      %s115 = ssub.s32 1024, 1024
      %116 = vsyncadd [#allocation12], %s115
      %s117 = sshll.u32 [#allocation13], 4
      %s118 = int_to_ptr.vmem [resolvable:$true] %s117
      %123 = dma.hbm_to_vmem [thread:$0]  %s13, 1024, %s118, [#allocation12], 512, 512, 32
    $region57: #{tpu_custom_call.1} parent=1 // pred_fallthru
      _
    // Predicated region
    $region58: #{tpu_custom_call.1} parent=1 // pred_check
      _
    $region59: #{tpu_custom_call.1} parent=1 // pred_check_branch
      %125 = sbr.rel (0) target = $region61
    $region60: #{tpu_custom_call.1} parent=1 // pred_region
      %126 = dma.done [#allocation3], 256
    $region61: #{tpu_custom_call.1} parent=1 // pred_fallthru
      _
    // Predicated region
    $region62: #{tpu_custom_call.1} parent=1 // pred_check
      _
    $region63: #{tpu_custom_call.1} parent=1 // pred_check_branch
      %128 = sbr.rel (0) target = $region65
    $region64: #{tpu_custom_call.1} parent=1 // pred_region
      %129 = dma.done [#allocation6], 128
    $region65: #{tpu_custom_call.1} parent=1 // pred_fallthru
      _
    // Predicated region
    $region66: #{tpu_custom_call.1} parent=1 // pred_check
      _
    $region67: #{tpu_custom_call.1} parent=1 // pred_check_branch
      %131 = sbr.rel (0) target = $region69
    $region68: #{tpu_custom_call.1} parent=1 // pred_region
      %132 = dma.done [#allocation6], 4096
    $region69: #{tpu_custom_call.1} parent=1 // pred_fallthru
      _
    // Predicated region
    $region70: #{tpu_custom_call.1} parent=1 // pred_check
      _
    $region71: #{tpu_custom_call.1} parent=1 // pred_check_branch
      %134 = sbr.rel (0) target = $region73
    $region72: #{tpu_custom_call.1} parent=1 // pred_region
      %135 = dma.done [#allocation9], 2048
    $region73: #{tpu_custom_call.1} parent=1 // pred_fallthru
      _
    // Predicated region
    $region74: #{tpu_custom_call.1} parent=1 // pred_check
      _
    $region75: #{tpu_custom_call.1} parent=1 // pred_check_branch
      %137 = sbr.rel (0) target = $region77
    $region76: #{tpu_custom_call.1} parent=1 // pred_region
      %138 = dma.done [#allocation9], 2048
    $region77: #{tpu_custom_call.1} parent=1 // pred_fallthru
      _
    // Predicated region
    $region78: #{tpu_custom_call.1} parent=1 // pred_check
      _
    $region79: #{tpu_custom_call.1} parent=1 // pred_check_branch
      %140 = sbr.rel (0) target = $region81
    $region80: #{tpu_custom_call.1} parent=1 // pred_region
      %141 = dma.done [#allocation12], 8192
    $region81: #{tpu_custom_call.1} parent=1 // pred_fallthru
      _
    // Predicated region
    $region82: #{tpu_custom_call.1} parent=1 // pred_check
      _
    $region83: #{tpu_custom_call.1} parent=1 // pred_check_branch
      %143 = sbr.rel (0) target = $region85
    $region84: #{tpu_custom_call.1} parent=1 // pred_region
      %144 = dma.done [#allocation12], 1024
    $region85: #{tpu_custom_call.1} parent=1 // pred_fallthru
      _
    %v145 = vld [vmem:[#allocation2] sm:$0xff]
    %v146 = vld [vmem:[#allocation2 + $0x8] sm:$0xff]
    %v147 = vld [vmem:[#allocation5] sm:$0xff]
    %v148 = vadd.f32 %v145, %v147
    %v149 = vadd.f32 %v146, %v147
    %150 = vadd.xlane.f32.xlu0 %v148
    %v151 = vpop.xlane.xlu0 %150
    %152 = vadd.xlane.f32.xlu0 %v149
    %v153 = vpop.xlane.xlu0 %152
    %v154 = vrcp.pop 128.0
    %v155 = vmul.f32 %v151, %v154
    %v156 = vmul.f32 %v153, %v154
    %v157 = vsub.f32 %v148, %v155
    %v158 = vsub.f32 %v149, %v156
    %v159 = vmul.f32 %v157, %v157
    %v160 = vmul.f32 %v158, %v158
    %161 = vadd.xlane.f32.xlu0 %v159
    %v162 = vpop.xlane.xlu0 %161
    %163 = vadd.xlane.f32.xlu0 %v160
    %v164 = vpop.xlane.xlu0 %163
    %v165 = vmul.f32 %v162, %v154
    %v166 = vmul.f32 %v164, %v154
    %v167 = vadd.f32 %v165, 1e-12
    %v168 = vadd.f32 %v166, 1e-12
    %v169 = vrsqrt.pop %v167
    %v170 = vrsqrt.pop %v168
    %v171 = vmul.f32 %v157, %v169
    %v172 = vmul.f32 %v158, %v170
    %v173 = vld [vmem:[%s2] sm:$0x1]
    %v175 = vlaneseq
    %v176 = vshrl.u32 %v175, 7
    %v177 = vsub.s32 0, %v176
    %v178 = vrot.slane %v173, %v177
    %v180 = vmul.f32 %v171, %v178
    %v181 = vmul.f32 %v172, %v178
    %v182 = vld [vmem:[%s3] sm:$0x1]
    %v184 = vlaneseq
    %v185 = vshrl.u32 %v184, 7
    %v186 = vsub.s32 0, %v185
    %v187 = vrot.slane %v182, %v186
    %v189 = vadd.f32 %v180, %v187
    %v190 = vadd.f32 %v181, %v187
    %191 = vst [vmem:[#allocation15] sm:$0xff] %v189
    %192 = vst [vmem:[#allocation15 + $0x8] sm:$0xff] %v190
    %v193 = vld [vmem:[#allocation7] sm:$0xff]
    %v194 = vld [vmem:[#allocation7 + $0x8] sm:$0xff]
    %v195 = vld [vmem:[#allocation7 + $0x10] sm:$0xff]
    %v196 = vld [vmem:[#allocation7 + $0x18] sm:$0xff]
    %v197 = vld [vmem:[#allocation7 + $0x20] sm:$0xff]
    %v198 = vld [vmem:[#allocation7 + $0x28] sm:$0xff]
    %v199 = vld [vmem:[#allocation7 + $0x30] sm:$0xff]
    %v200 = vld [vmem:[#allocation7 + $0x38] sm:$0xff]
    %v201 = vld [vmem:[#allocation7 + $0x40] sm:$0xff]
    %v202 = vld [vmem:[#allocation7 + $0x48] sm:$0xff]
    %v203 = vld [vmem:[#allocation7 + $0x50] sm:$0xff]
    %v204 = vld [vmem:[#allocation7 + $0x58] sm:$0xff]
    %v205 = vld [vmem:[#allocation7 + $0x60] sm:$0xff]
    %v206 = vld [vmem:[#allocation7 + $0x68] sm:$0xff]
    %v207 = vld [vmem:[#allocation7 + $0x70] sm:$0xff]
    %v208 = vld [vmem:[#allocation7 + $0x78] sm:$0xff]
    %v209 = vld [vmem:[#allocation7 + $0x80] sm:$0xff]
    %v210 = vld [vmem:[#allocation7 + $0x88] sm:$0xff]
    %v211 = vld [vmem:[#allocation7 + $0x90] sm:$0xff]
    %v212 = vld [vmem:[#allocation7 + $0x98] sm:$0xff]
    %v213 = vld [vmem:[#allocation7 + $0xa0] sm:$0xff]
    %v214 = vld [vmem:[#allocation7 + $0xa8] sm:$0xff]
    %v215 = vld [vmem:[#allocation7 + $0xb0] sm:$0xff]
    %v216 = vld [vmem:[#allocation7 + $0xb8] sm:$0xff]
    %v217 = vld [vmem:[#allocation7 + $0xc0] sm:$0xff]
    %v218 = vld [vmem:[#allocation7 + $0xc8] sm:$0xff]
    %v219 = vld [vmem:[#allocation7 + $0xd0] sm:$0xff]
    %v220 = vld [vmem:[#allocation7 + $0xd8] sm:$0xff]
    %v221 = vld [vmem:[#allocation7 + $0xe0] sm:$0xff]
    %v222 = vld [vmem:[#allocation7 + $0xe8] sm:$0xff]
    %v223 = vld [vmem:[#allocation7 + $0xf0] sm:$0xff]
    %v224 = vld [vmem:[#allocation7 + $0xf8] sm:$0xff]
    %v225 = vld [vmem:[%s5] sm:$0x3]
    %v227 = vlaneseq
    %v228 = vshrl.u32 %v227, 7
    %v229 = vsub.s32 0, %v228
    %v230 = vrot.slane %v225, %v229
    %v231 = vlaneseq
    %v232 = vshrl.u32 %v231, 7
    %v233 = vsub.s32 1, %v232
    %v234 = vrot.slane %v225, %v233
    %237 = vmatprep.subr.mxu0 %v194
    %238 = vmatpush1.msra.mxu0 %v193
    %239 = vmatprep.subr.mxu0 %v196
    %240 = vmatpush1.msra.mxu0 %v195
    %241 = vmatprep.subr.mxu0 %v198
    %242 = vmatpush1.msra.mxu0 %v197
    %243 = vmatprep.subr.mxu0 %v200
    %244 = vmatpush1.msra.mxu0 %v199
    %245 = vmatprep.subr.mxu0 %v202
    %246 = vmatpush1.msra.mxu0 %v201
    %247 = vmatprep.subr.mxu0 %v204
    %248 = vmatpush1.msra.mxu0 %v203
    %249 = vmatprep.subr.mxu0 %v206
    %250 = vmatpush1.msra.mxu0 %v205
    %251 = vmatprep.subr.mxu0 %v208
    %252 = vmatpush1.msra.mxu0 %v207
    %253 = vmatprep.subr.mxu0 %v210
    %254 = vmatpush1.msra.mxu0 %v209
    %255 = vmatprep.subr.mxu0 %v212
    %256 = vmatpush1.msra.mxu0 %v211
    %257 = vmatprep.subr.mxu0 %v214
    %258 = vmatpush1.msra.mxu0 %v213
    %259 = vmatprep.subr.mxu0 %v216
    %260 = vmatpush1.msra.mxu0 %v215
    %261 = vmatprep.subr.mxu0 %v218
    %262 = vmatpush1.msra.mxu0 %v217
    %263 = vmatprep.subr.mxu0 %v220
    %264 = vmatpush1.msra.mxu0 %v219
    %265 = vmatprep.subr.mxu0 %v222
    %266 = vmatpush1.msra.mxu0 %v221
    %267 = vmatprep.subr.mxu0 %v224
    %268 = vmatpush1.msra.mxu0 %v223
    %269 = vmatprep.subr.mxu0 0.0
    %270 = vmatpush1.msra.mxu0 0.0
    %271 = vmatprep.subr.mxu0 0.0
    %272 = vmatpush1.msra.mxu0 0.0
    %273 = vmatprep.subr.mxu0 0.0
    %274 = vmatpush1.msra.mxu0 0.0
    %275 = vmatprep.subr.mxu0 0.0
    %276 = vmatpush1.msra.mxu0 0.0
    %277 = vmatprep.subr.mxu0 0.0
    %278 = vmatpush1.msra.mxu0 0.0
    %279 = vmatprep.subr.mxu0 0.0
    %280 = vmatpush1.msra.mxu0 0.0
    %281 = vmatprep.subr.mxu0 0.0
    %282 = vmatpush1.msra.mxu0 0.0
    %283 = vmatprep.subr.mxu0 0.0
    %284 = vmatpush1.msra.mxu0 0.0
    %285 = vmatprep.subr.mxu0 0.0
    %286 = vmatpush1.msra.mxu0 0.0
    %287 = vmatprep.subr.mxu0 0.0
    %288 = vmatpush1.msra.mxu0 0.0
    %289 = vmatprep.subr.mxu0 0.0
    %290 = vmatpush1.msra.mxu0 0.0
    %291 = vmatprep.subr.mxu0 0.0
    %292 = vmatpush1.msra.mxu0 0.0
    %293 = vmatprep.subr.mxu0 0.0
    %294 = vmatpush1.msra.mxu0 0.0
    %295 = vmatprep.subr.mxu0 0.0
    %296 = vmatpush1.msra.mxu0 0.0
    %297 = vmatprep.subr.mxu0 0.0
    %298 = vmatpush1.msra.mxu0 0.0
    %299 = vmatprep.subr.mxu0 0.0
    %300 = vmatpush1.msra.mxu0 0.0
    %301 = vmatprep.mubr.f32.mxu0 0.0
    %302 = vmatmul.mubr.f32.gmra.mrb[0].mxu0 %v189
    %v303 = vpop.f32.mrb[0].mxu0
    %v304 = vadd.f32 %v230, %v303
    %v305 = vpop.f32.mrb[0].mxu0
    %v306 = vadd.f32 %v234, %v305
    %307 = vmatprep.mubr.f32.mxu0 0.0
    %308 = vmatmul.mubr.f32.gmra.mrb[0].mxu0 %v190
    %v309 = vpop.f32.mrb[0].mxu0
    %v310 = vadd.f32 %v230, %v309
    %v311 = vpop.f32.mrb[0].mxu0
    %v312 = vadd.f32 %v234, %v311
    %313 = vdwg.mxu0
    %v314 = vtanh.pop %v304
    %v315 = vtanh.pop %v306
    %v316 = vtanh.pop %v310
    %v317 = vtanh.pop %v312
    %v318 = vld [vmem:[#allocation8] sm:$0xff]
    %v319 = vld [vmem:[#allocation8 + $0x8] sm:$0xff]
    %v320 = vld [vmem:[#allocation8 + $0x10] sm:$0xff]
    %v321 = vld [vmem:[#allocation8 + $0x18] sm:$0xff]
    %v322 = vld [vmem:[#allocation8 + $0x20] sm:$0xff]
    %v323 = vld [vmem:[#allocation8 + $0x28] sm:$0xff]
    %v324 = vld [vmem:[#allocation8 + $0x30] sm:$0xff]
    %v325 = vld [vmem:[#allocation8 + $0x38] sm:$0xff]
    %v326 = vld [vmem:[#allocation8 + $0x40] sm:$0xff]
    %v327 = vld [vmem:[#allocation8 + $0x48] sm:$0xff]
    %v328 = vld [vmem:[#allocation8 + $0x50] sm:$0xff]
    %v329 = vld [vmem:[#allocation8 + $0x58] sm:$0xff]
    %v330 = vld [vmem:[#allocation8 + $0x60] sm:$0xff]
    %v331 = vld [vmem:[#allocation8 + $0x68] sm:$0xff]
    %v332 = vld [vmem:[#allocation8 + $0x70] sm:$0xff]
    %v333 = vld [vmem:[#allocation8 + $0x78] sm:$0xff]
    %v334 = vld [vmem:[%s7] sm:$0x1]
    %v336 = vlaneseq
    %v337 = vshrl.u32 %v336, 7
    %v338 = vsub.s32 0, %v337
    %v339 = vrot.slane %v334, %v338
    %341 = vmatprep.subr.mxu0 0.0
    %342 = vmatpush1.msra.mxu0 %v318
    %343 = vmatprep.subr.mxu0 0.0
    %344 = vmatpush1.msra.mxu0 %v319
    %345 = vmatprep.subr.mxu0 0.0
    %346 = vmatpush1.msra.mxu0 %v320
    %347 = vmatprep.subr.mxu0 0.0
    %348 = vmatpush1.msra.mxu0 %v321
    %349 = vmatprep.subr.mxu0 0.0
    %350 = vmatpush1.msra.mxu0 %v322
    %351 = vmatprep.subr.mxu0 0.0
    %352 = vmatpush1.msra.mxu0 %v323
    %353 = vmatprep.subr.mxu0 0.0
    %354 = vmatpush1.msra.mxu0 %v324
    %355 = vmatprep.subr.mxu0 0.0
    %356 = vmatpush1.msra.mxu0 %v325
    %357 = vmatprep.subr.mxu0 0.0
    %358 = vmatpush1.msra.mxu0 %v326
    %359 = vmatprep.subr.mxu0 0.0
    %360 = vmatpush1.msra.mxu0 %v327
    %361 = vmatprep.subr.mxu0 0.0
    %362 = vmatpush1.msra.mxu0 %v328
    %363 = vmatprep.subr.mxu0 0.0
    %364 = vmatpush1.msra.mxu0 %v329
    %365 = vmatprep.subr.mxu0 0.0
    %366 = vmatpush1.msra.mxu0 %v330
    %367 = vmatprep.subr.mxu0 0.0
    %368 = vmatpush1.msra.mxu0 %v331
    %369 = vmatprep.subr.mxu0 0.0
    %370 = vmatpush1.msra.mxu0 %v332
    %371 = vmatprep.subr.mxu0 0.0
    %372 = vmatpush1.msra.mxu0 %v333
    %373 = vmatprep.subr.mxu0 0.0
    %374 = vmatpush1.msra.mxu0 0.0
    %375 = vmatprep.subr.mxu0 0.0
    %376 = vmatpush1.msra.mxu0 0.0
    %377 = vmatprep.subr.mxu0 0.0
    %378 = vmatpush1.msra.mxu0 0.0
    %379 = vmatprep.subr.mxu0 0.0
    %380 = vmatpush1.msra.mxu0 0.0
    %381 = vmatprep.subr.mxu0 0.0
    %382 = vmatpush1.msra.mxu0 0.0
    %383 = vmatprep.subr.mxu0 0.0
    %384 = vmatpush1.msra.mxu0 0.0
    %385 = vmatprep.subr.mxu0 0.0
    %386 = vmatpush1.msra.mxu0 0.0
    %387 = vmatprep.subr.mxu0 0.0
    %388 = vmatpush1.msra.mxu0 0.0
    %389 = vmatprep.subr.mxu0 0.0
    %390 = vmatpush1.msra.mxu0 0.0
    %391 = vmatprep.subr.mxu0 0.0
    %392 = vmatpush1.msra.mxu0 0.0
    %393 = vmatprep.subr.mxu0 0.0
    %394 = vmatpush1.msra.mxu0 0.0
    %395 = vmatprep.subr.mxu0 0.0
    %396 = vmatpush1.msra.mxu0 0.0
    %397 = vmatprep.subr.mxu0 0.0
    %398 = vmatpush1.msra.mxu0 0.0
    %399 = vmatprep.subr.mxu0 0.0
    %400 = vmatpush1.msra.mxu0 0.0
    %401 = vmatprep.subr.mxu0 0.0
    %402 = vmatpush1.msra.mxu0 0.0
    %403 = vmatprep.subr.mxu0 0.0
    %404 = vmatpush1.msra.mxu0 0.0
    %405 = vmatprep.mubr.f32.mxu0 0.0
    %406 = vmatmul.mubr.f32.gmra.mrb[0].mxu0 %v314
    %v407 = vpop.f32.mrb[0].mxu0
    %v408 = vadd.f32 %v339, %v407
    %v409 = vpop.f32.mrb[0].mxu0
    %410 = vmatprep.mubr.f32.mxu0 0.0
    %411 = vmatmul.mubr.f32.gmra.mrb[0].mxu0 %v316
    %v412 = vpop.f32.mrb[0].mxu0
    %v413 = vadd.f32 %v339, %v412
    %v414 = vpop.f32.mrb[0].mxu0
    %415 = vdwg.mxu0
    %v416 = vld [vmem:[#allocation10] sm:$0xff]
    %v417 = vld [vmem:[#allocation10 + $0x8] sm:$0xff]
    %v418 = vld [vmem:[#allocation10 + $0x10] sm:$0xff]
    %v419 = vld [vmem:[#allocation10 + $0x18] sm:$0xff]
    %v420 = vld [vmem:[#allocation10 + $0x20] sm:$0xff]
    %v421 = vld [vmem:[#allocation10 + $0x28] sm:$0xff]
    %v422 = vld [vmem:[#allocation10 + $0x30] sm:$0xff]
    %v423 = vld [vmem:[#allocation10 + $0x38] sm:$0xff]
    %v424 = vld [vmem:[#allocation10 + $0x40] sm:$0xff]
    %v425 = vld [vmem:[#allocation10 + $0x48] sm:$0xff]
    %v426 = vld [vmem:[#allocation10 + $0x50] sm:$0xff]
    %v427 = vld [vmem:[#allocation10 + $0x58] sm:$0xff]
    %v428 = vld [vmem:[#allocation10 + $0x60] sm:$0xff]
    %v429 = vld [vmem:[#allocation10 + $0x68] sm:$0xff]
    %v430 = vld [vmem:[#allocation10 + $0x70] sm:$0xff]
    %v431 = vld [vmem:[#allocation10 + $0x78] sm:$0xff]
    %v432 = vld [vmem:[%s9] sm:$0x1]
    %v434 = vlaneseq
    %v435 = vshrl.u32 %v434, 7
    %v436 = vsub.s32 0, %v435
    %v437 = vrot.slane %v432, %v436
    %439 = vmatprep.subr.mxu0 0.0
    %440 = vmatpush1.msra.mxu0 %v416
    %441 = vmatprep.subr.mxu0 0.0
    %442 = vmatpush1.msra.mxu0 %v417
    %443 = vmatprep.subr.mxu0 0.0
    %444 = vmatpush1.msra.mxu0 %v418
    %445 = vmatprep.subr.mxu0 0.0
    %446 = vmatpush1.msra.mxu0 %v419
    %447 = vmatprep.subr.mxu0 0.0
    %448 = vmatpush1.msra.mxu0 %v420
    %449 = vmatprep.subr.mxu0 0.0
    %450 = vmatpush1.msra.mxu0 %v421
    %451 = vmatprep.subr.mxu0 0.0
    %452 = vmatpush1.msra.mxu0 %v422
    %453 = vmatprep.subr.mxu0 0.0
    %454 = vmatpush1.msra.mxu0 %v423
    %455 = vmatprep.subr.mxu0 0.0
    %456 = vmatpush1.msra.mxu0 %v424
    %457 = vmatprep.subr.mxu0 0.0
    %458 = vmatpush1.msra.mxu0 %v425
    %459 = vmatprep.subr.mxu0 0.0
    %460 = vmatpush1.msra.mxu0 %v426
    %461 = vmatprep.subr.mxu0 0.0
    %462 = vmatpush1.msra.mxu0 %v427
    %463 = vmatprep.subr.mxu0 0.0
    %464 = vmatpush1.msra.mxu0 %v428
    %465 = vmatprep.subr.mxu0 0.0
    %466 = vmatpush1.msra.mxu0 %v429
    %467 = vmatprep.subr.mxu0 0.0
    %468 = vmatpush1.msra.mxu0 %v430
    %469 = vmatprep.subr.mxu0 0.0
    %470 = vmatpush1.msra.mxu0 %v431
    %471 = vmatprep.subr.mxu0 0.0
    %472 = vmatpush1.msra.mxu0 0.0
    %473 = vmatprep.subr.mxu0 0.0
    %474 = vmatpush1.msra.mxu0 0.0
    %475 = vmatprep.subr.mxu0 0.0
    %476 = vmatpush1.msra.mxu0 0.0
    %477 = vmatprep.subr.mxu0 0.0
    %478 = vmatpush1.msra.mxu0 0.0
    %479 = vmatprep.subr.mxu0 0.0
    %480 = vmatpush1.msra.mxu0 0.0
    %481 = vmatprep.subr.mxu0 0.0
    %482 = vmatpush1.msra.mxu0 0.0
    %483 = vmatprep.subr.mxu0 0.0
    %484 = vmatpush1.msra.mxu0 0.0
    %485 = vmatprep.subr.mxu0 0.0
    %486 = vmatpush1.msra.mxu0 0.0
    %487 = vmatprep.subr.mxu0 0.0
    %488 = vmatpush1.msra.mxu0 0.0
    %489 = vmatprep.subr.mxu0 0.0
    %490 = vmatpush1.msra.mxu0 0.0
    %491 = vmatprep.subr.mxu0 0.0
    %492 = vmatpush1.msra.mxu0 0.0
    %493 = vmatprep.subr.mxu0 0.0
    %494 = vmatpush1.msra.mxu0 0.0
    %495 = vmatprep.subr.mxu0 0.0
    %496 = vmatpush1.msra.mxu0 0.0
    %497 = vmatprep.subr.mxu0 0.0
    %498 = vmatpush1.msra.mxu0 0.0
    %499 = vmatprep.subr.mxu0 0.0
    %500 = vmatpush1.msra.mxu0 0.0
    %501 = vmatprep.subr.mxu0 0.0
    %502 = vmatpush1.msra.mxu0 0.0
    %503 = vmatprep.mubr.f32.mxu0 0.0
    %504 = vmatmul.mubr.f32.gmra.mrb[0].mxu0 %v315
    %v505 = vpop.f32.mrb[0].mxu0
    %v506 = vadd.f32 %v437, %v505
    %v507 = vpop.f32.mrb[0].mxu0
    %508 = vmatprep.mubr.f32.mxu0 0.0
    %509 = vmatmul.mubr.f32.gmra.mrb[0].mxu0 %v317
    %v510 = vpop.f32.mrb[0].mxu0
    %v511 = vadd.f32 %v437, %v510
    %v512 = vpop.f32.mrb[0].mxu0
    %513 = vdwg.mxu0
    %v514 = vld [vmem:[%s11] sm:$0xff]
    %v515 = vld [vmem:[%s11 + $0x8] sm:$0xff]
    %v516 = vlaneseq
    %v517 = vshrl.u32 %v516, 7
    %v518 = vsub.s32 0, %v517
    %v519 = vrot.slane %v514, %v518
    %v520 = vlaneseq
    %v521 = vshrl.u32 %v520, 7
    %v522 = vsub.s32 0, %v521
    %v523 = vrot.slane %v515, %v522
    %524 = vst [vmem:[#allocation17] sm:$0xff] %v519
    %525 = vst [vmem:[#allocation17 + $0x8] sm:$0xff] %v408
    %526 = vst [vmem:[#allocation17 + $0x10] sm:$0xff] %v523
    %527 = vst [vmem:[#allocation17 + $0x18] sm:$0xff] %v413
    %v528 = vld [vmem:[#allocation11] sm:$0xff]
    %v529 = vld [vmem:[#allocation11 + $0x8] sm:$0xff]
    %v530 = vld [vmem:[#allocation11 + $0x10] sm:$0xff]
    %v531 = vld [vmem:[#allocation11 + $0x18] sm:$0xff]
    %v532 = vld [vmem:[#allocation11 + $0x20] sm:$0xff]
    %v533 = vld [vmem:[#allocation11 + $0x28] sm:$0xff]
    %v534 = vld [vmem:[#allocation11 + $0x30] sm:$0xff]
    %v535 = vld [vmem:[#allocation11 + $0x38] sm:$0xff]
    %v536 = vld [vmem:[#allocation11 + $0x40] sm:$0xff]
    %v537 = vld [vmem:[#allocation11 + $0x48] sm:$0xff]
    %v538 = vld [vmem:[#allocation11 + $0x50] sm:$0xff]
    %v539 = vld [vmem:[#allocation11 + $0x58] sm:$0xff]
    %v540 = vld [vmem:[#allocation11 + $0x60] sm:$0xff]
    %v541 = vld [vmem:[#allocation11 + $0x68] sm:$0xff]
    %v542 = vld [vmem:[#allocation11 + $0x70] sm:$0xff]
    %v543 = vld [vmem:[#allocation11 + $0x78] sm:$0xff]
    %v544 = vld [vmem:[#allocation11 + $0x80] sm:$0xff]
    %v545 = vld [vmem:[#allocation11 + $0x88] sm:$0xff]
    %v546 = vld [vmem:[#allocation11 + $0x90] sm:$0xff]
    %v547 = vld [vmem:[#allocation11 + $0x98] sm:$0xff]
    %v548 = vld [vmem:[#allocation11 + $0xa0] sm:$0xff]
    %v549 = vld [vmem:[#allocation11 + $0xa8] sm:$0xff]
    %v550 = vld [vmem:[#allocation11 + $0xb0] sm:$0xff]
    %v551 = vld [vmem:[#allocation11 + $0xb8] sm:$0xff]
    %v552 = vld [vmem:[#allocation11 + $0xc0] sm:$0xff]
    %v553 = vld [vmem:[#allocation11 + $0xc8] sm:$0xff]
    %v554 = vld [vmem:[#allocation11 + $0xd0] sm:$0xff]
    %v555 = vld [vmem:[#allocation11 + $0xd8] sm:$0xff]
    %v556 = vld [vmem:[#allocation11 + $0xe0] sm:$0xff]
    %v557 = vld [vmem:[#allocation11 + $0xe8] sm:$0xff]
    %v558 = vld [vmem:[#allocation11 + $0xf0] sm:$0xff]
    %v559 = vld [vmem:[#allocation11 + $0xf8] sm:$0xff]
    %v560 = vld [vmem:[#allocation11 + $0x100] sm:$0xff]
    %v561 = vld [vmem:[#allocation11 + $0x108] sm:$0xff]
    %v562 = vld [vmem:[#allocation11 + $0x110] sm:$0xff]
    %v563 = vld [vmem:[#allocation11 + $0x118] sm:$0xff]
    %v564 = vld [vmem:[#allocation11 + $0x120] sm:$0xff]
    %v565 = vld [vmem:[#allocation11 + $0x128] sm:$0xff]
    %v566 = vld [vmem:[#allocation11 + $0x130] sm:$0xff]
    %v567 = vld [vmem:[#allocation11 + $0x138] sm:$0xff]
    %v568 = vld [vmem:[#allocation11 + $0x140] sm:$0xff]
    %v569 = vld [vmem:[#allocation11 + $0x148] sm:$0xff]
    %v570 = vld [vmem:[#allocation11 + $0x150] sm:$0xff]
    %v571 = vld [vmem:[#allocation11 + $0x158] sm:$0xff]
    %v572 = vld [vmem:[#allocation11 + $0x160] sm:$0xff]
    %v573 = vld [vmem:[#allocation11 + $0x168] sm:$0xff]
    %v574 = vld [vmem:[#allocation11 + $0x170] sm:$0xff]
    %v575 = vld [vmem:[#allocation11 + $0x178] sm:$0xff]
    %v576 = vld [vmem:[#allocation11 + $0x180] sm:$0xff]
    %v577 = vld [vmem:[#allocation11 + $0x188] sm:$0xff]
    %v578 = vld [vmem:[#allocation11 + $0x190] sm:$0xff]
    %v579 = vld [vmem:[#allocation11 + $0x198] sm:$0xff]
    %v580 = vld [vmem:[#allocation11 + $0x1a0] sm:$0xff]
    %v581 = vld [vmem:[#allocation11 + $0x1a8] sm:$0xff]
    %v582 = vld [vmem:[#allocation11 + $0x1b0] sm:$0xff]
    %v583 = vld [vmem:[#allocation11 + $0x1b8] sm:$0xff]
    %v584 = vld [vmem:[#allocation11 + $0x1c0] sm:$0xff]
    %v585 = vld [vmem:[#allocation11 + $0x1c8] sm:$0xff]
    %v586 = vld [vmem:[#allocation11 + $0x1d0] sm:$0xff]
    %v587 = vld [vmem:[#allocation11 + $0x1d8] sm:$0xff]
    %v588 = vld [vmem:[#allocation11 + $0x1e0] sm:$0xff]
    %v589 = vld [vmem:[#allocation11 + $0x1e8] sm:$0xff]
    %v590 = vld [vmem:[#allocation11 + $0x1f0] sm:$0xff]
    %v591 = vld [vmem:[#allocation11 + $0x1f8] sm:$0xff]
    %592 = vmatprep.subr.mxu0 0.0
    %593 = vmatpush1.xpose.msra.mxu0 %v528
    %594 = vmatprep.subr.mxu0 0.0
    %595 = vmatpush1.xpose.msra.mxu0 %v529
    %596 = vmatprep.subr.mxu0 0.0
    %597 = vmatpush1.xpose.msra.mxu0 %v530
    %598 = vmatprep.subr.mxu0 0.0
    %599 = vmatpush1.xpose.msra.mxu0 %v531
    %600 = vmatprep.subr.mxu0 0.0
    %601 = vmatpush1.xpose.msra.mxu0 %v532
    %602 = vmatprep.subr.mxu0 0.0
    %603 = vmatpush1.xpose.msra.mxu0 %v533
    %604 = vmatprep.subr.mxu0 0.0
    %605 = vmatpush1.xpose.msra.mxu0 %v534
    %606 = vmatprep.subr.mxu0 0.0
    %607 = vmatpush1.xpose.msra.mxu0 %v535
    %608 = vmatprep.subr.mxu0 0.0
    %609 = vmatpush1.xpose.msra.mxu0 %v536
    %610 = vmatprep.subr.mxu0 0.0
    %611 = vmatpush1.xpose.msra.mxu0 %v537
    %612 = vmatprep.subr.mxu0 0.0
    %613 = vmatpush1.xpose.msra.mxu0 %v538
    %614 = vmatprep.subr.mxu0 0.0
    %615 = vmatpush1.xpose.msra.mxu0 %v539
    %616 = vmatprep.subr.mxu0 0.0
    %617 = vmatpush1.xpose.msra.mxu0 %v540
    %618 = vmatprep.subr.mxu0 0.0
    %619 = vmatpush1.xpose.msra.mxu0 %v541
    %620 = vmatprep.subr.mxu0 0.0
    %621 = vmatpush1.xpose.msra.mxu0 %v542
    %622 = vmatprep.subr.mxu0 0.0
    %623 = vmatpush1.xpose.msra.mxu0 %v543
    %624 = vmatprep.subr.mxu0 0.0
    %625 = vmatpush1.xpose.msra.mxu0 %v544
    %626 = vmatprep.subr.mxu0 0.0
    %627 = vmatpush1.xpose.msra.mxu0 %v545
    %628 = vmatprep.subr.mxu0 0.0
    %629 = vmatpush1.xpose.msra.mxu0 %v546
    %630 = vmatprep.subr.mxu0 0.0
    %631 = vmatpush1.xpose.msra.mxu0 %v547
    %632 = vmatprep.subr.mxu0 0.0
    %633 = vmatpush1.xpose.msra.mxu0 %v548
    %634 = vmatprep.subr.mxu0 0.0
    %635 = vmatpush1.xpose.msra.mxu0 %v549
    %636 = vmatprep.subr.mxu0 0.0
    %637 = vmatpush1.xpose.msra.mxu0 %v550
    %638 = vmatprep.subr.mxu0 0.0
    %639 = vmatpush1.xpose.msra.mxu0 %v551
    %640 = vmatprep.subr.mxu0 0.0
    %641 = vmatpush1.xpose.msra.mxu0 %v552
    %642 = vmatprep.subr.mxu0 0.0
    %643 = vmatpush1.xpose.msra.mxu0 %v553
    %644 = vmatprep.subr.mxu0 0.0
    %645 = vmatpush1.xpose.msra.mxu0 %v554
    %646 = vmatprep.subr.mxu0 0.0
    %647 = vmatpush1.xpose.msra.mxu0 %v555
    %648 = vmatprep.subr.mxu0 0.0
    %649 = vmatpush1.xpose.msra.mxu0 %v556
    %650 = vmatprep.subr.mxu0 0.0
    %651 = vmatpush1.xpose.msra.mxu0 %v557
    %652 = vmatprep.subr.mxu0 0.0
    %653 = vmatpush1.xpose.msra.mxu0 %v558
    %654 = vmatprep.subr.mxu0 0.0
    %655 = vmatpush1.xpose.msra.mxu0 %v559
    %656 = vmatprep.mubr.f32.mxu0 0.0
    %657 = vmatmul.mubr.f32.gmra.mrb[0].mxu0 %v408
    %v658 = vpop.f32.mrb[0].mxu0
    %v659 = vadd.f32 0.0, %v658
    %v660 = vpop.f32.mrb[0].mxu0
    %v661 = vadd.f32 0.0, %v660
    %662 = vmatprep.mubr.f32.mxu0 0.0
    %663 = vmatmul.mubr.f32.gmra.mrb[0].mxu0 %v413
    %v664 = vpop.f32.mrb[0].mxu0
    %v665 = vadd.f32 0.0, %v664
    %v666 = vpop.f32.mrb[0].mxu0
    %v667 = vadd.f32 0.0, %v666
    %668 = vdwg.mxu0
    %669 = vmatprep.subr.mxu0 0.0
    %670 = vmatpush1.xpose.msra.mxu0 %v560
    %671 = vmatprep.subr.mxu0 0.0
    %672 = vmatpush1.xpose.msra.mxu0 %v561
    %673 = vmatprep.subr.mxu0 0.0
    %674 = vmatpush1.xpose.msra.mxu0 %v562
    %675 = vmatprep.subr.mxu0 0.0
    %676 = vmatpush1.xpose.msra.mxu0 %v563
    %677 = vmatprep.subr.mxu0 0.0
    %678 = vmatpush1.xpose.msra.mxu0 %v564
    %679 = vmatprep.subr.mxu0 0.0
    %680 = vmatpush1.xpose.msra.mxu0 %v565
    %681 = vmatprep.subr.mxu0 0.0
    %682 = vmatpush1.xpose.msra.mxu0 %v566
    %683 = vmatprep.subr.mxu0 0.0
    %684 = vmatpush1.xpose.msra.mxu0 %v567
    %685 = vmatprep.subr.mxu0 0.0
    %686 = vmatpush1.xpose.msra.mxu0 %v568
    %687 = vmatprep.subr.mxu0 0.0
    %688 = vmatpush1.xpose.msra.mxu0 %v569
    %689 = vmatprep.subr.mxu0 0.0
    %690 = vmatpush1.xpose.msra.mxu0 %v570
    %691 = vmatprep.subr.mxu0 0.0
    %692 = vmatpush1.xpose.msra.mxu0 %v571
    %693 = vmatprep.subr.mxu0 0.0
    %694 = vmatpush1.xpose.msra.mxu0 %v572
    %695 = vmatprep.subr.mxu0 0.0
    %696 = vmatpush1.xpose.msra.mxu0 %v573
    %697 = vmatprep.subr.mxu0 0.0
    %698 = vmatpush1.xpose.msra.mxu0 %v574
    %699 = vmatprep.subr.mxu0 0.0
    %700 = vmatpush1.xpose.msra.mxu0 %v575
    %701 = vmatprep.subr.mxu0 0.0
    %702 = vmatpush1.xpose.msra.mxu0 %v576
    %703 = vmatprep.subr.mxu0 0.0
    %704 = vmatpush1.xpose.msra.mxu0 %v577
    %705 = vmatprep.subr.mxu0 0.0
    %706 = vmatpush1.xpose.msra.mxu0 %v578
    %707 = vmatprep.subr.mxu0 0.0
    %708 = vmatpush1.xpose.msra.mxu0 %v579
    %709 = vmatprep.subr.mxu0 0.0
    %710 = vmatpush1.xpose.msra.mxu0 %v580
    %711 = vmatprep.subr.mxu0 0.0
    %712 = vmatpush1.xpose.msra.mxu0 %v581
    %713 = vmatprep.subr.mxu0 0.0
    %714 = vmatpush1.xpose.msra.mxu0 %v582
    %715 = vmatprep.subr.mxu0 0.0
    %716 = vmatpush1.xpose.msra.mxu0 %v583
    %717 = vmatprep.subr.mxu0 0.0
    %718 = vmatpush1.xpose.msra.mxu0 %v584
    %719 = vmatprep.subr.mxu0 0.0
    %720 = vmatpush1.xpose.msra.mxu0 %v585
    %721 = vmatprep.subr.mxu0 0.0
    %722 = vmatpush1.xpose.msra.mxu0 %v586
    %723 = vmatprep.subr.mxu0 0.0
    %724 = vmatpush1.xpose.msra.mxu0 %v587
    %725 = vmatprep.subr.mxu0 0.0
    %726 = vmatpush1.xpose.msra.mxu0 %v588
    %727 = vmatprep.subr.mxu0 0.0
    %728 = vmatpush1.xpose.msra.mxu0 %v589
    %729 = vmatprep.subr.mxu0 0.0
    %730 = vmatpush1.xpose.msra.mxu0 %v590
    %731 = vmatprep.subr.mxu0 0.0
    %732 = vmatpush1.xpose.msra.mxu0 %v591
    %733 = vmatprep.mubr.f32.mxu0 0.0
    %734 = vmatmul.mubr.f32.gmra.mrb[0].mxu0 %v408
    %v735 = vpop.f32.mrb[0].mxu0
    %v736 = vadd.f32 0.0, %v735
    %v737 = vpop.f32.mrb[0].mxu0
    %v738 = vadd.f32 0.0, %v737
    %739 = vmatprep.mubr.f32.mxu0 0.0
    %740 = vmatmul.mubr.f32.gmra.mrb[0].mxu0 %v413
    %v741 = vpop.f32.mrb[0].mxu0
    %v742 = vadd.f32 0.0, %v741
    %v743 = vpop.f32.mrb[0].mxu0
    %v744 = vadd.f32 0.0, %v743
    %745 = vdwg.mxu0
    %746 = vmatprep.subr.mxu0 0.0
    %747 = vmatpush1.xpose.msra.mxu0 %v514
    %748 = vmatprep.subr.mxu0 0.0
    %749 = vmatpush1.xpose.msra.mxu0 0.0
    %750 = vmatprep.subr.mxu0 0.0
    %751 = vmatpush1.xpose.msra.mxu0 0.0
    %752 = vmatprep.subr.mxu0 0.0
    %753 = vmatpush1.xpose.msra.mxu0 0.0
    %754 = vmatprep.subr.mxu0 0.0
    %755 = vmatpush1.xpose.msra.mxu0 0.0
    %756 = vmatprep.subr.mxu0 0.0
    %757 = vmatpush1.xpose.msra.mxu0 0.0
    %758 = vmatprep.subr.mxu0 0.0
    %759 = vmatpush1.xpose.msra.mxu0 0.0
    %760 = vmatprep.subr.mxu0 0.0
    %761 = vmatpush1.xpose.msra.mxu0 0.0
    %762 = vmatprep.subr.mxu0 0.0
    %763 = vmatpush1.xpose.msra.mxu0 0.0
    %764 = vmatprep.subr.mxu0 0.0
    %765 = vmatpush1.xpose.msra.mxu0 0.0
    %766 = vmatprep.subr.mxu0 0.0
    %767 = vmatpush1.xpose.msra.mxu0 0.0
    %768 = vmatprep.subr.mxu0 0.0
    %769 = vmatpush1.xpose.msra.mxu0 0.0
    %770 = vmatprep.subr.mxu0 0.0
    %771 = vmatpush1.xpose.msra.mxu0 0.0
    %772 = vmatprep.subr.mxu0 0.0
    %773 = vmatpush1.xpose.msra.mxu0 0.0
    %774 = vmatprep.subr.mxu0 0.0
    %775 = vmatpush1.xpose.msra.mxu0 0.0
    %776 = vmatprep.subr.mxu0 0.0
    %777 = vmatpush1.xpose.msra.mxu0 0.0
    %778 = vmatprep.subr.mxu0 0.0
    %779 = vmatpush1.xpose.msra.mxu0 0.0
    %780 = vmatprep.subr.mxu0 0.0
    %781 = vmatpush1.xpose.msra.mxu0 0.0
    %782 = vmatprep.subr.mxu0 0.0
    %783 = vmatpush1.xpose.msra.mxu0 0.0
    %784 = vmatprep.subr.mxu0 0.0
    %785 = vmatpush1.xpose.msra.mxu0 0.0
    %786 = vmatprep.subr.mxu0 0.0
    %787 = vmatpush1.xpose.msra.mxu0 0.0
    %788 = vmatprep.subr.mxu0 0.0
    %789 = vmatpush1.xpose.msra.mxu0 0.0
    %790 = vmatprep.subr.mxu0 0.0
    %791 = vmatpush1.xpose.msra.mxu0 0.0
    %792 = vmatprep.subr.mxu0 0.0
    %793 = vmatpush1.xpose.msra.mxu0 0.0
    %794 = vmatprep.subr.mxu0 0.0
    %795 = vmatpush1.xpose.msra.mxu0 0.0
    %796 = vmatprep.subr.mxu0 0.0
    %797 = vmatpush1.xpose.msra.mxu0 0.0
    %798 = vmatprep.subr.mxu0 0.0
    %799 = vmatpush1.xpose.msra.mxu0 0.0
    %800 = vmatprep.subr.mxu0 0.0
    %801 = vmatpush1.xpose.msra.mxu0 0.0
    %802 = vmatprep.subr.mxu0 0.0
    %803 = vmatpush1.xpose.msra.mxu0 0.0
    %804 = vmatprep.subr.mxu0 0.0
    %805 = vmatpush1.xpose.msra.mxu0 0.0
    %806 = vmatprep.subr.mxu0 0.0
    %807 = vmatpush1.xpose.msra.mxu0 0.0
    %808 = vmatprep.subr.mxu0 0.0
    %809 = vmatpush1.xpose.msra.mxu0 0.0
    %810 = vmatprep.mubr.f32.mxu0 0.0
    %811 = vmatmul.mubr.f32.gmra.mrb[0].mxu0 %v506
    %v812 = vpop.f32.mrb[0].mxu0
    %v813 = vadd.f32 0.0, %v812
    %v814 = vpop.f32.mrb[0].mxu0
    %815 = vdwg.mxu0
    %816 = vmatprep.subr.mxu0 0.0
    %817 = vmatpush1.xpose.msra.mxu0 %v515
    %818 = vmatprep.subr.mxu0 0.0
    %819 = vmatpush1.xpose.msra.mxu0 0.0
    %820 = vmatprep.subr.mxu0 0.0
    %821 = vmatpush1.xpose.msra.mxu0 0.0
    %822 = vmatprep.subr.mxu0 0.0
    %823 = vmatpush1.xpose.msra.mxu0 0.0
    %824 = vmatprep.subr.mxu0 0.0
    %825 = vmatpush1.xpose.msra.mxu0 0.0
    %826 = vmatprep.subr.mxu0 0.0
    %827 = vmatpush1.xpose.msra.mxu0 0.0
    %828 = vmatprep.subr.mxu0 0.0
    %829 = vmatpush1.xpose.msra.mxu0 0.0
    %830 = vmatprep.subr.mxu0 0.0
    %831 = vmatpush1.xpose.msra.mxu0 0.0
    %832 = vmatprep.subr.mxu0 0.0
    %833 = vmatpush1.xpose.msra.mxu0 0.0
    %834 = vmatprep.subr.mxu0 0.0
    %835 = vmatpush1.xpose.msra.mxu0 0.0
    %836 = vmatprep.subr.mxu0 0.0
    %837 = vmatpush1.xpose.msra.mxu0 0.0
    %838 = vmatprep.subr.mxu0 0.0
    %839 = vmatpush1.xpose.msra.mxu0 0.0
    %840 = vmatprep.subr.mxu0 0.0
    %841 = vmatpush1.xpose.msra.mxu0 0.0
    %842 = vmatprep.subr.mxu0 0.0
    %843 = vmatpush1.xpose.msra.mxu0 0.0
    %844 = vmatprep.subr.mxu0 0.0
    %845 = vmatpush1.xpose.msra.mxu0 0.0
    %846 = vmatprep.subr.mxu0 0.0
    %847 = vmatpush1.xpose.msra.mxu0 0.0
    %848 = vmatprep.subr.mxu0 0.0
    %849 = vmatpush1.xpose.msra.mxu0 0.0
    %850 = vmatprep.subr.mxu0 0.0
    %851 = vmatpush1.xpose.msra.mxu0 0.0
    %852 = vmatprep.subr.mxu0 0.0
    %853 = vmatpush1.xpose.msra.mxu0 0.0
    %854 = vmatprep.subr.mxu0 0.0
    %855 = vmatpush1.xpose.msra.mxu0 0.0
    %856 = vmatprep.subr.mxu0 0.0
    %857 = vmatpush1.xpose.msra.mxu0 0.0
    %858 = vmatprep.subr.mxu0 0.0
    %859 = vmatpush1.xpose.msra.mxu0 0.0
    %860 = vmatprep.subr.mxu0 0.0
    %861 = vmatpush1.xpose.msra.mxu0 0.0
    %862 = vmatprep.subr.mxu0 0.0
    %863 = vmatpush1.xpose.msra.mxu0 0.0
    %864 = vmatprep.subr.mxu0 0.0
    %865 = vmatpush1.xpose.msra.mxu0 0.0
    %866 = vmatprep.subr.mxu0 0.0
    %867 = vmatpush1.xpose.msra.mxu0 0.0
    %868 = vmatprep.subr.mxu0 0.0
    %869 = vmatpush1.xpose.msra.mxu0 0.0
    %870 = vmatprep.subr.mxu0 0.0
    %871 = vmatpush1.xpose.msra.mxu0 0.0
    %872 = vmatprep.subr.mxu0 0.0
    %873 = vmatpush1.xpose.msra.mxu0 0.0
    %874 = vmatprep.subr.mxu0 0.0
    %875 = vmatpush1.xpose.msra.mxu0 0.0
    %876 = vmatprep.subr.mxu0 0.0
    %877 = vmatpush1.xpose.msra.mxu0 0.0
    %878 = vmatprep.subr.mxu0 0.0
    %879 = vmatpush1.xpose.msra.mxu0 0.0
    %880 = vmatprep.mubr.f32.mxu0 0.0
    %881 = vmatmul.mubr.f32.gmra.mrb[0].mxu0 %v511
    %v882 = vpop.f32.mrb[0].mxu0
    %v883 = vadd.f32 0.0, %v882
    %v884 = vpop.f32.mrb[0].mxu0
    %885 = vdwg.mxu0
    %v886 = vld [vmem:[%s12] sm:$0x1]
    %v887 = vld [vmem:[%s12 + $0x1] sm:$0x1]
    %vm888 = vcmp.ne.f32.partialorder %v886, 0.0
    %vm889 = vcmp.ne.f32.partialorder %v887, 0.0
    %v890 = vsel %vm888, 1, 0
    %v891 = vsel %vm889, 1, 0
    %v892 = vlaneseq
    %v893 = vshrl.u32 %v892, 7
    %v894 = vsub.s32 0, %v893
    %v895 = vrot.slane %v890, %v894
    %v896 = vlaneseq
    %v897 = vshrl.u32 %v896, 7
    %v898 = vsub.s32 0, %v897
    %v899 = vrot.slane %v891, %v898
    %vm900 = vcmp.eq.s32.totalorder %v895, 1
    %vm901 = vcmp.eq.s32.totalorder %v899, 1
    %v902 = vsel %vm900, %v813, 0.0
    %v903 = vsel %vm901, %v883, 0.0
    %v904 = vld [vmem:[#allocation13] sm:$0xff]
    %v905 = vld [vmem:[#allocation13 + $0x8] sm:$0xff]
    %v906 = vld [vmem:[#allocation13 + $0x10] sm:$0xff]
    %v907 = vld [vmem:[#allocation13 + $0x18] sm:$0xff]
    %v908 = vld [vmem:[#allocation13 + $0x20] sm:$0xff]
    %v909 = vld [vmem:[#allocation13 + $0x28] sm:$0xff]
    %v910 = vld [vmem:[#allocation13 + $0x30] sm:$0xff]
    %v911 = vld [vmem:[#allocation13 + $0x38] sm:$0xff]
    %vm912 = vcmask 64512
    %v914 = vsel %vm912, %v902, 0
    %916 = vmatprep.subr.mxu0 %v905
    %917 = vmatpush1.msra.mxu0 %v904
    %918 = vmatprep.subr.mxu0 0.0
    %919 = vmatpush1.msra.mxu0 0.0
    %920 = vmatprep.subr.mxu0 0.0
    %921 = vmatpush1.msra.mxu0 0.0
    %922 = vmatprep.subr.mxu0 0.0
    %923 = vmatpush1.msra.mxu0 0.0
    %924 = vmatprep.subr.mxu0 0.0
    %925 = vmatpush1.msra.mxu0 0.0
    %926 = vmatprep.subr.mxu0 0.0
    %927 = vmatpush1.msra.mxu0 0.0
    %928 = vmatprep.subr.mxu0 0.0
    %929 = vmatpush1.msra.mxu0 0.0
    %930 = vmatprep.subr.mxu0 0.0
    %931 = vmatpush1.msra.mxu0 0.0
    %932 = vmatprep.subr.mxu0 0.0
    %933 = vmatpush1.msra.mxu0 0.0
    %934 = vmatprep.subr.mxu0 0.0
    %935 = vmatpush1.msra.mxu0 0.0
    %936 = vmatprep.subr.mxu0 0.0
    %937 = vmatpush1.msra.mxu0 0.0
    %938 = vmatprep.subr.mxu0 0.0
    %939 = vmatpush1.msra.mxu0 0.0
    %940 = vmatprep.subr.mxu0 0.0
    %941 = vmatpush1.msra.mxu0 0.0
    %942 = vmatprep.subr.mxu0 0.0
    %943 = vmatpush1.msra.mxu0 0.0
    %944 = vmatprep.subr.mxu0 0.0
    %945 = vmatpush1.msra.mxu0 0.0
    %946 = vmatprep.subr.mxu0 0.0
    %947 = vmatpush1.msra.mxu0 0.0
    %948 = vmatprep.subr.mxu0 0.0
    %949 = vmatpush1.msra.mxu0 0.0
    %950 = vmatprep.subr.mxu0 0.0
    %951 = vmatpush1.msra.mxu0 0.0
    %952 = vmatprep.subr.mxu0 0.0
    %953 = vmatpush1.msra.mxu0 0.0
    %954 = vmatprep.subr.mxu0 0.0
    %955 = vmatpush1.msra.mxu0 0.0
    %956 = vmatprep.subr.mxu0 0.0
    %957 = vmatpush1.msra.mxu0 0.0
    %958 = vmatprep.subr.mxu0 0.0
    %959 = vmatpush1.msra.mxu0 0.0
    %960 = vmatprep.subr.mxu0 0.0
    %961 = vmatpush1.msra.mxu0 0.0
    %962 = vmatprep.subr.mxu0 0.0
    %963 = vmatpush1.msra.mxu0 0.0
    %964 = vmatprep.subr.mxu0 0.0
    %965 = vmatpush1.msra.mxu0 0.0
    %966 = vmatprep.subr.mxu0 0.0
    %967 = vmatpush1.msra.mxu0 0.0
    %968 = vmatprep.subr.mxu0 0.0
    %969 = vmatpush1.msra.mxu0 0.0
    %970 = vmatprep.subr.mxu0 0.0
    %971 = vmatpush1.msra.mxu0 0.0
    %972 = vmatprep.subr.mxu0 0.0
    %973 = vmatpush1.msra.mxu0 0.0
    %974 = vmatprep.subr.mxu0 0.0
    %975 = vmatpush1.msra.mxu0 0.0
    %976 = vmatprep.subr.mxu0 0.0
    %977 = vmatpush1.msra.mxu0 0.0
    %978 = vmatprep.subr.mxu0 0.0
    %979 = vmatpush1.msra.mxu0 0.0
    %980 = vmatprep.mubr.f32.mxu0 0.0
    %981 = vmatmul.mubr.f32.gmra.mrb[0].mxu0 %v914
    %v982 = vpop.f32.mrb[0].mxu0
    %v983 = vadd.f32 0.0, %v982
    %v984 = vpop.f32.mrb[0].mxu0
    %v985 = vadd.f32 0.0, %v984
    %986 = vdwg.mxu0
    %987 = vmatprep.subr.mxu0 %v907
    %988 = vmatpush1.msra.mxu0 %v906
    %989 = vmatprep.subr.mxu0 0.0
    %990 = vmatpush1.msra.mxu0 0.0
    %991 = vmatprep.subr.mxu0 0.0
    %992 = vmatpush1.msra.mxu0 0.0
    %993 = vmatprep.subr.mxu0 0.0
    %994 = vmatpush1.msra.mxu0 0.0
    %995 = vmatprep.subr.mxu0 0.0
    %996 = vmatpush1.msra.mxu0 0.0
    %997 = vmatprep.subr.mxu0 0.0
    %998 = vmatpush1.msra.mxu0 0.0
    %999 = vmatprep.subr.mxu0 0.0
    %1000 = vmatpush1.msra.mxu0 0.0
    %1001 = vmatprep.subr.mxu0 0.0
    %1002 = vmatpush1.msra.mxu0 0.0
    %1003 = vmatprep.subr.mxu0 0.0
    %1004 = vmatpush1.msra.mxu0 0.0
    %1005 = vmatprep.subr.mxu0 0.0
    %1006 = vmatpush1.msra.mxu0 0.0
    %1007 = vmatprep.subr.mxu0 0.0
    %1008 = vmatpush1.msra.mxu0 0.0
    %1009 = vmatprep.subr.mxu0 0.0
    %1010 = vmatpush1.msra.mxu0 0.0
    %1011 = vmatprep.subr.mxu0 0.0
    %1012 = vmatpush1.msra.mxu0 0.0
    %1013 = vmatprep.subr.mxu0 0.0
    %1014 = vmatpush1.msra.mxu0 0.0
    %1015 = vmatprep.subr.mxu0 0.0
    %1016 = vmatpush1.msra.mxu0 0.0
    %1017 = vmatprep.subr.mxu0 0.0
    %1018 = vmatpush1.msra.mxu0 0.0
    %1019 = vmatprep.subr.mxu0 0.0
    %1020 = vmatpush1.msra.mxu0 0.0
    %1021 = vmatprep.subr.mxu0 0.0
    %1022 = vmatpush1.msra.mxu0 0.0
    %1023 = vmatprep.subr.mxu0 0.0
    %1024 = vmatpush1.msra.mxu0 0.0
    %1025 = vmatprep.subr.mxu0 0.0
    %1026 = vmatpush1.msra.mxu0 0.0
    %1027 = vmatprep.subr.mxu0 0.0
    %1028 = vmatpush1.msra.mxu0 0.0
    %1029 = vmatprep.subr.mxu0 0.0
    %1030 = vmatpush1.msra.mxu0 0.0
    %1031 = vmatprep.subr.mxu0 0.0
    %1032 = vmatpush1.msra.mxu0 0.0
    %1033 = vmatprep.subr.mxu0 0.0
    %1034 = vmatpush1.msra.mxu0 0.0
    %1035 = vmatprep.subr.mxu0 0.0
    %1036 = vmatpush1.msra.mxu0 0.0
    %1037 = vmatprep.subr.mxu0 0.0
    %1038 = vmatpush1.msra.mxu0 0.0
    %1039 = vmatprep.subr.mxu0 0.0
    %1040 = vmatpush1.msra.mxu0 0.0
    %1041 = vmatprep.subr.mxu0 0.0
    %1042 = vmatpush1.msra.mxu0 0.0
    %1043 = vmatprep.subr.mxu0 0.0
    %1044 = vmatpush1.msra.mxu0 0.0
    %1045 = vmatprep.subr.mxu0 0.0
    %1046 = vmatpush1.msra.mxu0 0.0
    %1047 = vmatprep.subr.mxu0 0.0
    %1048 = vmatpush1.msra.mxu0 0.0
    %1049 = vmatprep.subr.mxu0 0.0
    %1050 = vmatpush1.msra.mxu0 0.0
    %1051 = vmatprep.mubr.f32.mxu0 0.0
    %1052 = vmatmul.mubr.f32.gmra.mrb[0].mxu0 %v914
    %v1053 = vpop.f32.mrb[0].mxu0
    %v1054 = vadd.f32 0.0, %v1053
    %v1055 = vpop.f32.mrb[0].mxu0
    %v1056 = vadd.f32 0.0, %v1055
    %1057 = vdwg.mxu0
    %v1059 = vsel %vm912, %v903, 0
    %1061 = vmatprep.subr.mxu0 %v909
    %1062 = vmatpush1.msra.mxu0 %v908
    %1063 = vmatprep.subr.mxu0 0.0
    %1064 = vmatpush1.msra.mxu0 0.0
    %1065 = vmatprep.subr.mxu0 0.0
    %1066 = vmatpush1.msra.mxu0 0.0
    %1067 = vmatprep.subr.mxu0 0.0
    %1068 = vmatpush1.msra.mxu0 0.0
    %1069 = vmatprep.subr.mxu0 0.0
    %1070 = vmatpush1.msra.mxu0 0.0
    %1071 = vmatprep.subr.mxu0 0.0
    %1072 = vmatpush1.msra.mxu0 0.0
    %1073 = vmatprep.subr.mxu0 0.0
    %1074 = vmatpush1.msra.mxu0 0.0
    %1075 = vmatprep.subr.mxu0 0.0
    %1076 = vmatpush1.msra.mxu0 0.0
    %1077 = vmatprep.subr.mxu0 0.0
    %1078 = vmatpush1.msra.mxu0 0.0
    %1079 = vmatprep.subr.mxu0 0.0
    %1080 = vmatpush1.msra.mxu0 0.0
    %1081 = vmatprep.subr.mxu0 0.0
    %1082 = vmatpush1.msra.mxu0 0.0
    %1083 = vmatprep.subr.mxu0 0.0
    %1084 = vmatpush1.msra.mxu0 0.0
    %1085 = vmatprep.subr.mxu0 0.0
    %1086 = vmatpush1.msra.mxu0 0.0
    %1087 = vmatprep.subr.mxu0 0.0
    %1088 = vmatpush1.msra.mxu0 0.0
    %1089 = vmatprep.subr.mxu0 0.0
    %1090 = vmatpush1.msra.mxu0 0.0
    %1091 = vmatprep.subr.mxu0 0.0
    %1092 = vmatpush1.msra.mxu0 0.0
    %1093 = vmatprep.subr.mxu0 0.0
    %1094 = vmatpush1.msra.mxu0 0.0
    %1095 = vmatprep.subr.mxu0 0.0
    %1096 = vmatpush1.msra.mxu0 0.0
    %1097 = vmatprep.subr.mxu0 0.0
    %1098 = vmatpush1.msra.mxu0 0.0
    %1099 = vmatprep.subr.mxu0 0.0
    %1100 = vmatpush1.msra.mxu0 0.0
    %1101 = vmatprep.subr.mxu0 0.0
    %1102 = vmatpush1.msra.mxu0 0.0
    %1103 = vmatprep.subr.mxu0 0.0
    %1104 = vmatpush1.msra.mxu0 0.0
    %1105 = vmatprep.subr.mxu0 0.0
    %1106 = vmatpush1.msra.mxu0 0.0
    %1107 = vmatprep.subr.mxu0 0.0
    %1108 = vmatpush1.msra.mxu0 0.0
    %1109 = vmatprep.subr.mxu0 0.0
    %1110 = vmatpush1.msra.mxu0 0.0
    %1111 = vmatprep.subr.mxu0 0.0
    %1112 = vmatpush1.msra.mxu0 0.0
    %1113 = vmatprep.subr.mxu0 0.0
    %1114 = vmatpush1.msra.mxu0 0.0
    %1115 = vmatprep.subr.mxu0 0.0
    %1116 = vmatpush1.msra.mxu0 0.0
    %1117 = vmatprep.subr.mxu0 0.0
    %1118 = vmatpush1.msra.mxu0 0.0
    %1119 = vmatprep.subr.mxu0 0.0
    %1120 = vmatpush1.msra.mxu0 0.0
    %1121 = vmatprep.subr.mxu0 0.0
    %1122 = vmatpush1.msra.mxu0 0.0
    %1123 = vmatprep.subr.mxu0 0.0
    %1124 = vmatpush1.msra.mxu0 0.0
    %1125 = vmatprep.mubr.f32.mxu0 0.0
    %1126 = vmatmul.mubr.f32.gmra.mrb[0].mxu0 %v1059
    %v1127 = vpop.f32.mrb[0].mxu0
    %v1128 = vadd.f32 0.0, %v1127
    %v1129 = vpop.f32.mrb[0].mxu0
    %v1130 = vadd.f32 0.0, %v1129
    %1131 = vdwg.mxu0
    %1132 = vmatprep.subr.mxu0 %v911
    %1133 = vmatpush1.msra.mxu0 %v910
    %1134 = vmatprep.subr.mxu0 0.0
    %1135 = vmatpush1.msra.mxu0 0.0
    %1136 = vmatprep.subr.mxu0 0.0
    %1137 = vmatpush1.msra.mxu0 0.0
    %1138 = vmatprep.subr.mxu0 0.0
    %1139 = vmatpush1.msra.mxu0 0.0
    %1140 = vmatprep.subr.mxu0 0.0
    %1141 = vmatpush1.msra.mxu0 0.0
    %1142 = vmatprep.subr.mxu0 0.0
    %1143 = vmatpush1.msra.mxu0 0.0
    %1144 = vmatprep.subr.mxu0 0.0
    %1145 = vmatpush1.msra.mxu0 0.0
    %1146 = vmatprep.subr.mxu0 0.0
    %1147 = vmatpush1.msra.mxu0 0.0
    %1148 = vmatprep.subr.mxu0 0.0
    %1149 = vmatpush1.msra.mxu0 0.0
    %1150 = vmatprep.subr.mxu0 0.0
    %1151 = vmatpush1.msra.mxu0 0.0
    %1152 = vmatprep.subr.mxu0 0.0
    %1153 = vmatpush1.msra.mxu0 0.0
    %1154 = vmatprep.subr.mxu0 0.0
    %1155 = vmatpush1.msra.mxu0 0.0
    %1156 = vmatprep.subr.mxu0 0.0
    %1157 = vmatpush1.msra.mxu0 0.0
    %1158 = vmatprep.subr.mxu0 0.0
    %1159 = vmatpush1.msra.mxu0 0.0
    %1160 = vmatprep.subr.mxu0 0.0
    %1161 = vmatpush1.msra.mxu0 0.0
    %1162 = vmatprep.subr.mxu0 0.0
    %1163 = vmatpush1.msra.mxu0 0.0
    %1164 = vmatprep.subr.mxu0 0.0
    %1165 = vmatpush1.msra.mxu0 0.0
    %1166 = vmatprep.subr.mxu0 0.0
    %1167 = vmatpush1.msra.mxu0 0.0
    %1168 = vmatprep.subr.mxu0 0.0
    %1169 = vmatpush1.msra.mxu0 0.0
    %1170 = vmatprep.subr.mxu0 0.0
    %1171 = vmatpush1.msra.mxu0 0.0
    %1172 = vmatprep.subr.mxu0 0.0
    %1173 = vmatpush1.msra.mxu0 0.0
    %1174 = vmatprep.subr.mxu0 0.0
    %1175 = vmatpush1.msra.mxu0 0.0
    %1176 = vmatprep.subr.mxu0 0.0
    %1177 = vmatpush1.msra.mxu0 0.0
    %1178 = vmatprep.subr.mxu0 0.0
    %1179 = vmatpush1.msra.mxu0 0.0
    %1180 = vmatprep.subr.mxu0 0.0
    %1181 = vmatpush1.msra.mxu0 0.0
    %1182 = vmatprep.subr.mxu0 0.0
    %1183 = vmatpush1.msra.mxu0 0.0
    %1184 = vmatprep.subr.mxu0 0.0
    %1185 = vmatpush1.msra.mxu0 0.0
    %1186 = vmatprep.subr.mxu0 0.0
    %1187 = vmatpush1.msra.mxu0 0.0
    %1188 = vmatprep.subr.mxu0 0.0
    %1189 = vmatpush1.msra.mxu0 0.0
    %1190 = vmatprep.subr.mxu0 0.0
    %1191 = vmatpush1.msra.mxu0 0.0
    %1192 = vmatprep.subr.mxu0 0.0
    %1193 = vmatpush1.msra.mxu0 0.0
    %1194 = vmatprep.subr.mxu0 0.0
    %1195 = vmatpush1.msra.mxu0 0.0
    %1196 = vmatprep.mubr.f32.mxu0 0.0
    %1197 = vmatmul.mubr.f32.gmra.mrb[0].mxu0 %v1059
    %v1198 = vpop.f32.mrb[0].mxu0
    %v1199 = vadd.f32 0.0, %v1198
    %v1200 = vpop.f32.mrb[0].mxu0
    %v1201 = vadd.f32 0.0, %v1200
    %1202 = vdwg.mxu0
    %v1203 = vadd.f32 %v659, %v983
    %v1204 = vadd.f32 %v661, %v985
    %v1205 = vadd.f32 %v736, %v1054
    %v1206 = vadd.f32 %v738, %v1056
    %v1207 = vadd.f32 %v665, %v1128
    %v1208 = vadd.f32 %v667, %v1130
    %v1209 = vadd.f32 %v742, %v1199
    %v1210 = vadd.f32 %v744, %v1201
    %1211 = vst [vmem:[#allocation14] sm:$0xff] %v1203
    %1212 = vst [vmem:[#allocation14 + $0x8] sm:$0xff] %v1204
    %1213 = vst [vmem:[#allocation14 + $0x10] sm:$0xff] %v1205
    %1214 = vst [vmem:[#allocation14 + $0x18] sm:$0xff] %v1206
    %1215 = vst [vmem:[#allocation14 + $0x20] sm:$0xff] %v1207
    %1216 = vst [vmem:[#allocation14 + $0x28] sm:$0xff] %v1208
    %1217 = vst [vmem:[#allocation14 + $0x30] sm:$0xff] %v1209
    %1218 = vst [vmem:[#allocation14 + $0x38] sm:$0xff] %v1210
    // Predicated region
    $region86: #{tpu_custom_call.1} parent=1 // pred_check
      _
    $region87: #{tpu_custom_call.1} parent=1 // pred_check_branch
      %1220 = sbr.rel (0) target = $region89
    $region88: #{tpu_custom_call.1} parent=1 // pred_region
      %s1222 = ssub.s32 1024, 1024
      %1223 = vsyncadd [#allocation4], %s1222
      %s1224 = sshll.u32 [#allocation14], 4
      %s1225 = int_to_ptr.vmem [resolvable:$true] %s1224
      %1230 = dma.vmem_to_hbm [thread:$0]  %s1225, 1024, %s14, [#allocation4], 512, 512, 32
    $region89: #{tpu_custom_call.1} parent=1 // pred_fallthru
      _
    // Predicated region
    $region90: #{tpu_custom_call.1} parent=1 // pred_check
      _
    $region91: #{tpu_custom_call.1} parent=1 // pred_check_branch
      %1232 = sbr.rel (0) target = $region93
    $region92: #{tpu_custom_call.1} parent=1 // pred_region
      %s1234 = ssub.s32 256, 256
      %1235 = vsyncadd [#allocation16], %s1234
      %s1236 = sshll.u32 [#allocation15], 4
      %s1237 = int_to_ptr.vmem [resolvable:$true] %s1236
      %1242 = dma.vmem_to_hbm [thread:$0]  %s1237, 256, %s15, [#allocation16], 128, 128, 8
    $region93: #{tpu_custom_call.1} parent=1 // pred_fallthru
      _
    // Predicated region
    $region94: #{tpu_custom_call.1} parent=1 // pred_check
      _
    $region95: #{tpu_custom_call.1} parent=1 // pred_check_branch
      %1244 = sbr.rel (0) target = $region97
    $region96: #{tpu_custom_call.1} parent=1 // pred_region
      %s1246 = ssub.s32 512, 512
      %1247 = vsyncadd [#allocation16], %s1246
      %s1248 = sshll.u32 [#allocation17], 4
      %s1249 = int_to_ptr.vmem [resolvable:$true] %s1248
      %1254 = dma.vmem_to_hbm [thread:$0]  %s1249, 512, %s16, [#allocation16], 256, 256, 16
    $region97: #{tpu_custom_call.1} parent=1 // pred_fallthru
      _
    // Predicated region
    $region98: #{tpu_custom_call.1} parent=1 // pred_check
      _
    $region99: #{tpu_custom_call.1} parent=1 // pred_check_branch
      %1256 = sbr.rel (0) target = $region101
    $region100: #{tpu_custom_call.1} parent=1 // pred_region
      %1257 = dma.done [#allocation4], 1024
    $region101: #{tpu_custom_call.1} parent=1 // pred_fallthru
      _
    // Predicated region
    $region102: #{tpu_custom_call.1} parent=1 // pred_check
      _
    $region103: #{tpu_custom_call.1} parent=1 // pred_check_branch
      %1259 = sbr.rel (0) target = $region105
    $region104: #{tpu_custom_call.1} parent=1 // pred_region
      %1260 = dma.done [#allocation16], 256
    $region105: #{tpu_custom_call.1} parent=1 // pred_fallthru
      _
    // Predicated region
    $region106: #{tpu_custom_call.1} parent=1 // pred_check
      _
    $region107: #{tpu_custom_call.1} parent=1 // pred_check_branch
      %1262 = sbr.rel (0) target = $region109
    $region108: #{tpu_custom_call.1} parent=1 // pred_region
      %1263 = dma.done [#allocation16], 512
    $region109: #{tpu_custom_call.1} parent=1 // pred_fallthru
      _
    %1264 = vsyncpa [#allocation3], 1
    %1265 = vsyncpa [#allocation6], 1
    %1266 = vsyncpa [#allocation9], 1
    %1267 = vsyncpa [#allocation12], 1
    %1268 = vsyncpa [#allocation4], 1
    %1269 = vsyncpa [#allocation16], 1

</llo_original>
